<compile_context>
chip_gen: v6e
topology: v6e:2x2x1
jax: 0.10.0
libtpu: 0.0.40
codegen_flags: <defaults>
</compile_context>

<pallas_src>
import functools

import numpy as np
import jax
import jax.numpy as jnp
from jax import lax
from jax.experimental import pallas as pl
from jax.experimental.pallas import tpu as pltpu

BN_EPS = 1e-5


def _round_up(x, m):
    return (x + m - 1) // m * m


# ------------------------------ Pallas kernel ------------------------------ #

def _fe_cnn2_kernel(a0_ref, m0_ref, w0_ref, w1_ref, w2_ref, vec_ref, src_ref,
                    o_ref, *, geoms, ncols, cpads, inv_cnt):
    """Whole FE_CNN_2 forward, VMEM-resident.

    Activation layout per stage: (Cpad, LAP) float32; real data lives at
    columns [ML, ML + L) with L = N*(H+2)*(W+2) (zero-padded spatial, flattened
    row-major over (n, h, w)); every other column is exactly zero, so each 3x3
    tap is a plain static lane-offset slice.
    """
    f32 = jnp.float32

    def conv3x3(a, wmat, wp, ml, lc):
        # 9 taps = static lane-offset slices; Cin is padded to a multiple of 8,
        # so the sublane concat is tile-aligned (no relayout).
        taps = []
        for ky in range(3):
            for kx in range(3):
                off = (ky - 1) * wp + (kx - 1)
                taps.append(a[:, ml + off: ml + off + lc])
        patches = jnp.concatenate(taps, axis=0)            # (9*Cin_pad, lc)
        return jnp.dot(wmat, patches, preferred_element_type=f32)

    def pool2x2_scatter(y, wp, lm, src_row):
        # 2x2 max over 4 lane-shifted views (one-hot scatter below only ever
        # selects interior, in-bounds positions).
        m = jnp.maximum(jnp.maximum(y[:, 0:lm], y[:, 1:1 + lm]),
                        jnp.maximum(y[:, wp:wp + lm], y[:, wp + 1:wp + 1 + lm]))
        # Build the 0/1 scatter matrix in-kernel (no HBM constant): column q of
        # the next-stage layout takes pooled value at row src_row[q] (or 0 if
        # src_row[q] == -1).  Exact selection, so default matmul precision is
        # bit-safe here.
        ncol = src_row.shape[1]
        p = lax.broadcasted_iota(jnp.int32, (lm, ncol), 0)
        s = jnp.where(p == src_row, f32(1.0), f32(0.0))
        return jnp.dot(m, s, preferred_element_type=f32)

    c0p, c1p, c2p = cpads

    # ---- stage 0: conv0 (bias dropped) + BatchNorm (batch stats) + ReLU + pool
    wp, ml, lc, lm = geoms[0]
    y = conv3x3(a0_ref[...], w0_ref[...], wp, ml, lc)       # (8, LC0)
    mask = m0_ref[...]                                       # (1, LC0) valid pixels
    ym = y * mask
    sum_y = jnp.sum(ym, axis=1, keepdims=True)
    sum_y2 = jnp.sum(ym * y, axis=1, keepdims=True)
    mean = sum_y * inv_cnt
    var = sum_y2 * inv_cnt - mean * mean                     # one-pass variance
    scale = vec_ref[0:c0p, 0:1] * lax.rsqrt(var + BN_EPS)    # gamma * rsqrt
    shift = vec_ref[0:c0p, 1:2] - mean * scale               # beta - mean*scale
    y = jnp.maximum(y * scale + shift, 0.0)
    a1 = pool2x2_scatter(y, wp, lm, src_ref[0:1, 0:ncols[0]])     # (8, LAP1)

    # ---- stage 1: conv1 + bias + ReLU + pool ------------------------------- #
    wp, ml, lc, lm = geoms[1]
    y = jnp.maximum(conv3x3(a1, w1_ref[...], wp, ml, lc) + vec_ref[0:c1p, 2:3],
                    0.0)
    a2 = pool2x2_scatter(y, wp, lm, src_ref[8:9, 0:ncols[1]])     # (16, LAP2)

    # ---- stage 2: conv2 + bias + ReLU + pool ------------------------------- #
    wp, ml, lc, lm = geoms[2]
    y = jnp.maximum(conv3x3(a2, w2_ref[...], wp, ml, lc) + vec_ref[0:c2p, 3:4],
                    0.0)
    o_ref[...] = pool2x2_scatter(y, wp, lm, src_ref[16:17, 0:ncols[2]])


# ------------------------- host-side constant builders ---------------------- #

def _stage_geom(N, h, w):
    hp, wp = h + 2, w + 2
    L = N * hp * wp
    ml = wp + 1                                   # margin so every tap slice fits
    lm = _round_up(L - wp - 1, 8)                 # pooled-max width (8-aligned)
    lc = _round_up(max(L, lm + wp + 1), 128)      # conv working width (128-aligned)
    lap = _round_up(lc + 2 * ml, 128)             # activation buffer width
    return dict(H=h, W=w, Hp=hp, Wp=wp, L=L, ML=ml, LM=lm, LC=lc, LAP=lap)


def _pool_src(N, g_src, g_dst, ncol):
    """int32 (1, ncol): for each destination column q of the next-stage flat
    layout, the source row index in the pooled-max array (-1 => column is
    margin/zero-padding and stays exactly 0)."""
    Hp, Wp = g_src["Hp"], g_src["Wp"]
    Ho, Wo = g_src["H"] // 2, g_src["W"] // 2
    src = np.full((1, ncol), -1, np.int32)
    for n in range(N):
        for i in range(Ho):
            for j in range(Wo):
                p = (n * Hp + 2 * i + 1) * Wp + (2 * j + 1)
                if g_dst is None:                          # final dense layout
                    q = (n * Ho + i) * Wo + j
                else:                                      # next padded layout
                    q = g_dst["ML"] + (n * g_dst["Hp"] + i + 1) * g_dst["Wp"] + (j + 1)
                src[0, q] = p
    return src


def _valid_mask(N, g):
    m = np.zeros((N, g["Hp"], g["Wp"]), np.float32)
    m[:, 1:g["H"] + 1, 1:g["W"] + 1] = 1.0
    flat = np.zeros((1, g["LC"]), np.float32)
    flat[0, :g["L"]] = m.reshape(-1)
    return flat


def _wmat(w_hwio, cin_pad, cout_pad):
    """(3,3,Cin,Cout) -> (Cout_pad, 9*Cin_pad); column order (ky, kx, ci)."""
    kh, kw, cin, cout = w_hwio.shape
    wt = jnp.transpose(w_hwio, (3, 0, 1, 2)).reshape(cout, kh * kw, cin)
    wt = jnp.pad(wt, ((0, cout_pad - cout), (0, 0), (0, cin_pad - cin)))
    return wt.reshape(cout_pad, kh * kw * cin_pad).astype(jnp.float32)


# --------------------------------- wrapper ---------------------------------- #

def fe_cnn_2_forward(x_nchw, params):
    """Pallas implementation of FE_CNN_2.forward (NCHW in, NCHW out)."""
    N, cin0, H0, W0 = x_nchw.shape
    assert cin0 == 1 and H0 % 8 == 0 and W0 % 8 == 0, (N, cin0, H0, W0)

    g0 = _stage_geom(N, H0, W0)
    g1 = _stage_geom(N, H0 // 2, W0 // 2)
    g2 = _stage_geom(N, H0 // 4, W0 // 4)
    Ho, Wo = g2["H"] // 2, g2["W"] // 2
    mout = N * Ho * Wo
    mout_p = _round_up(max(mout, 128), 128)                 # lane-dense output
    f32 = jnp.float32

    c0 = params["w0"].shape[-1]                             # 3
    c1 = params["w1"].shape[-1]                             # 10
    c2 = params["w2"].shape[-1]                             # 20
    c0p, c1p, c2p = _round_up(c0, 8), _round_up(c1, 8), _round_up(c2, 8)

    # --- input packing: (N,1,H,W) -> (8, LAP0), data at row 0, cols [ML0, ML0+L0)
    xpad = jnp.pad(x_nchw[:, 0].astype(f32), ((0, 0), (1, 1), (1, 1)))
    a0 = jnp.pad(xpad.reshape(1, g0["L"]),
                 ((0, 7), (g0["ML"], g0["LAP"] - g0["L"] - g0["ML"])))

    w0 = _wmat(params["w0"], 8, c0p)        # conv0 bias dropped (cancels in BN)
    w1 = _wmat(params["w1"], c0p, c1p)
    w2 = _wmat(params["w2"], c1p, c2p)

    # --- all tiny per-channel vectors packed into one (24, 4) array ---------- #
    def _col(v):
        return jnp.pad(v.astype(f32), (0, c2p - v.shape[0]))
    vecs = jnp.stack([_col(params["bn_g"]), _col(params["bn_b"]),
                      _col(params["b1"]), _col(params["b2"])], axis=1)

    mask0 = jnp.asarray(_valid_mask(N, g0))

    # --- packed scatter-source tables (rows 0 / 8 / 16: sublane-aligned) ----- #
    ncols = (g1["LAP"], g2["LAP"], mout_p)
    maxw = max(ncols)
    srcs_np = np.full((24, maxw), -1, np.int32)
    srcs_np[0, :ncols[0]] = _pool_src(N, g0, g1, ncols[0])[0]
    srcs_np[8, :ncols[1]] = _pool_src(N, g1, g2, ncols[1])[0]
    srcs_np[16, :ncols[2]] = _pool_src(N, g2, None, ncols[2])[0]
    srcs = jnp.asarray(srcs_np)

    args = (a0, mask0, w0, w1, w2, vecs, srcs)

    kernel = functools.partial(
        _fe_cnn2_kernel,
        geoms=tuple((g["Wp"], g["ML"], g["LC"], g["LM"]) for g in (g0, g1, g2)),
        ncols=ncols,
        cpads=(c0p, c1p, c2p),
        inv_cnt=1.0 / float(N * H0 * W0))

    # NOTE: at large N*H*W the in-kernel (LM, LAP_next) scatter grows
    # quadratically in VMEM; for bigger inputs it should be tiled over the
    # destination axis with a real grid (and the BN stats split across cores).
    out2d = pl.pallas_call(
        kernel,
        out_shape=jax.ShapeDtypeStruct((c2p, mout_p), f32),
        grid=(1,),
        in_specs=[pl.BlockSpec(a.shape, lambda i: (0, 0)) for a in args],
        out_specs=pl.BlockSpec((c2p, mout_p), lambda i: (0, 0)),
        compiler_params=pltpu.CompilerParams(
            dimension_semantics=("arbitrary",)),
    )(*args)

    # (Cout_pad, Mout_pad) -> NCHW
    out = out2d[:c2, :mout].reshape(c2, N, Ho, Wo)
    return jnp.transpose(out, (1, 0, 2, 3))


# ---------------------- pure-JAX reference (for checking) ------------------- #

def ref_forward(x_nchw, params):
    def conv(x, w_hwio, b):
        return lax.conv_general_dilated(
            x, w_hwio, window_strides=(1, 1), padding="SAME",
            dimension_numbers=("NCHW", "HWIO", "NCHW"),
            precision=lax.Precision.HIGHEST) + b[None, :, None, None]

    def pool(x):
        N, C, H, W = x.shape
        return x.reshape(N, C, H // 2, 2, W // 2, 2).max(axis=(3, 5))

    y = conv(x_nchw, params["w0"], params["b0"])
    mean = y.mean(axis=(0, 2, 3), keepdims=True)
    var = ((y - mean) ** 2).mean(axis=(0, 2, 3), keepdims=True)
    y = (y - mean) * lax.rsqrt(var + BN_EPS)
    y = y * params["bn_g"][None, :, None, None] + params["bn_b"][None, :, None, None]
    y = pool(jnp.maximum(y, 0.0))
    y = pool(jnp.maximum(conv(y, params["w1"], params["b1"]), 0.0))
    y = pool(jnp.maximum(conv(y, params["w2"], params["b2"]), 0.0))
    return y


# ----------------------------------- main ------------------------------------ #

def init_params(key):
    ks = jax.random.split(key, 6)
    return {
        # conv0: Conv2d(1, 3, 3, padding=1)  -> HWIO (3,3,1,3)
        "w0": 0.3 * jax.random.normal(ks[0], (3, 3, 1, 3), jnp.float32),
        "b0": 0.1 * jax.random.normal(ks[1], (3,), jnp.float32),
        # BatchNorm2d(3) affine params (PyTorch default: gamma=1, beta=0)
        "bn_g": jnp.ones((3,), jnp.float32),
        "bn_b": jnp.zeros((3,), jnp.float32),
        # conv1: Conv2d(3, 10, 3, padding=1) -> HWIO (3,3,3,10)
        "w1": 0.2 * jax.random.normal(ks[2], (3, 3, 3, 10), jnp.float32),
        "b1": 0.1 * jax.random.normal(ks[3], (10,), jnp.float32),
        # conv2: Conv2d(10, 20, 3, padding=1) -> HWIO (3,3,10,20)
        "w2": 0.15 * jax.random.normal(ks[4], (3, 3, 10, 20), jnp.float32),
        "b2": 0.1 * jax.random.normal(ks[5], (20,), jnp.float32),
    }


if __name__ == "__main__":
    key = jax.random.PRNGKey(0)
    k_x, k_p = jax.random.split(key)
    # NCHW input like PyTorch: batch=2, 1 channel, 16x16 spatial
    x = jax.random.normal(k_x, (2, 1, 16, 16), jnp.float32)
    params = init_params(k_p)

    out = jax.jit(fe_cnn_2_forward)(x, params)
    out = jax.block_until_ready(out)

    assert out.shape == (2, 20, 2, 2), out.shape

    ref = ref_forward(x, params)
    assert jnp.allclose(out, ref, atol=1e-3, rtol=1e-3), \
        float(jnp.max(jnp.abs(out - ref)))

    print("KERNEL_OK")
</pallas_src>

<mosaic_0001>
module attributes {stable_mosaic.version = 11 : i64} {
  func.func @_fe_cnn2_kernel(%arg0: i32, %arg1: memref<8x896xf32, #tpu.memory_space<vmem>>, %arg2: memref<1x768xf32, #tpu.memory_space<vmem>>, %arg3: memref<8x72xf32, #tpu.memory_space<vmem>>, %arg4: memref<16x72xf32, #tpu.memory_space<vmem>>, %arg5: memref<24x144xf32, #tpu.memory_space<vmem>>, %arg6: memref<24x4xf32, #tpu.memory_space<vmem>>, %arg7: memref<24x384xi32, #tpu.memory_space<vmem>>, %arg8: memref<24x128xf32, #tpu.memory_space<vmem>>) attributes {dimension_semantics = [#tpu.dimension_semantics<arbitrary>], iteration_bounds = array<i64: 1>, scalar_prefetch = 0 : i64, scratch_operands = 0 : i64, tpu.core_type = #tpu.core_type<tc>, window_params = [{pipeline_mode = #tpu.pipeline_mode<synchronous>, transform_indices = @transform_0, window_bounds = array<i64: 8, 896>}, {pipeline_mode = #tpu.pipeline_mode<synchronous>, transform_indices = @transform_1, window_bounds = array<i64: 1, 768>}, {pipeline_mode = #tpu.pipeline_mode<synchronous>, transform_indices = @transform_2, window_bounds = array<i64: 8, 72>}, {pipeline_mode = #tpu.pipeline_mode<synchronous>, transform_indices = @transform_3, window_bounds = array<i64: 16, 72>}, {pipeline_mode = #tpu.pipeline_mode<synchronous>, transform_indices = @transform_4, window_bounds = array<i64: 24, 144>}, {pipeline_mode = #tpu.pipeline_mode<synchronous>, transform_indices = @transform_5, window_bounds = array<i64: 24, 4>}, {pipeline_mode = #tpu.pipeline_mode<synchronous>, transform_indices = @transform_6, window_bounds = array<i64: 24, 384>}, {pipeline_mode = #tpu.pipeline_mode<synchronous>, transform_indices = @transform_7, window_bounds = array<i64: 24, 128>}]} {
    %c0 = arith.constant 0 : index
    %c0_0 = arith.constant 0 : index
    %0 = vector.load %arg1[%c0, %c0_0] : memref<8x896xf32, #tpu.memory_space<vmem>>, vector<8x896xf32>
    %c0_1 = arith.constant 0 : index
    %c0_2 = arith.constant 0 : index
    %1 = vector.load %arg3[%c0_1, %c0_2] : memref<8x72xf32, #tpu.memory_space<vmem>>, vector<8x72xf32>
    %2 = vector.extract_strided_slice %0 {offsets = [0, 0], sizes = [8, 768], strides = [1, 1]} : vector<8x896xf32> to vector<8x768xf32>
    %3 = vector.extract_strided_slice %0 {offsets = [0, 1], sizes = [8, 768], strides = [1, 1]} : vector<8x896xf32> to vector<8x768xf32>
    %4 = vector.extract_strided_slice %0 {offsets = [0, 2], sizes = [8, 768], strides = [1, 1]} : vector<8x896xf32> to vector<8x768xf32>
    %5 = vector.extract_strided_slice %0 {offsets = [0, 18], sizes = [8, 768], strides = [1, 1]} : vector<8x896xf32> to vector<8x768xf32>
    %6 = vector.extract_strided_slice %0 {offsets = [0, 19], sizes = [8, 768], strides = [1, 1]} : vector<8x896xf32> to vector<8x768xf32>
    %7 = vector.extract_strided_slice %0 {offsets = [0, 20], sizes = [8, 768], strides = [1, 1]} : vector<8x896xf32> to vector<8x768xf32>
    %8 = vector.extract_strided_slice %0 {offsets = [0, 36], sizes = [8, 768], strides = [1, 1]} : vector<8x896xf32> to vector<8x768xf32>
    %9 = vector.extract_strided_slice %0 {offsets = [0, 37], sizes = [8, 768], strides = [1, 1]} : vector<8x896xf32> to vector<8x768xf32>
    %10 = vector.extract_strided_slice %0 {offsets = [0, 38], sizes = [8, 768], strides = [1, 1]} : vector<8x896xf32> to vector<8x768xf32>
    %11 = tpu.concatenate %2, %3, %4, %5, %6, %7, %8, %9, %10 in 0 : vector<8x768xf32>, vector<8x768xf32>, vector<8x768xf32>, vector<8x768xf32>, vector<8x768xf32>, vector<8x768xf32>, vector<8x768xf32>, vector<8x768xf32>, vector<8x768xf32> -> vector<72x768xf32>
    %cst = arith.constant dense<0.000000e+00> : vector<8x768xf32>
    %12 = tpu.matmul %1, %11, %cst {dimension_numbers = #tpu.dot_dimension_numbers<[1], [0], [0], [1], [0, 0, 1, 1], [], []>} : vector<8x72xf32>, vector<72x768xf32>, vector<8x768xf32> -> vector<8x768xf32>
    %c0_3 = arith.constant 0 : index
    %c0_4 = arith.constant 0 : index
    %13 = vector.load %arg2[%c0_3, %c0_4] : memref<1x768xf32, #tpu.memory_space<vmem>>, vector<1x768xf32>
    %14 = vector.broadcast %13 : vector<1x768xf32> to vector<8x768xf32>
    %15 = arith.mulf %12, %14 : vector<8x768xf32>
    %cst_5 = arith.constant dense<0.000000e+00> : vector<8xf32>
    %16 = vector.multi_reduction <add>, %15, %cst_5 [1] : vector<8x768xf32> to vector<8xf32>
    %17 = vector.shape_cast %16 : vector<8xf32> to vector<8x1xf32>
    %18 = arith.mulf %15, %12 : vector<8x768xf32>
    %cst_6 = arith.constant dense<0.000000e+00> : vector<8xf32>
    %19 = vector.multi_reduction <add>, %18, %cst_6 [1] : vector<8x768xf32> to vector<8xf32>
    %20 = vector.shape_cast %19 : vector<8xf32> to vector<8x1xf32>
    %cst_7 = arith.constant 0.001953125 : f32
    %21 = vector.broadcast %cst_7 : f32 to vector<8x1xf32>
    %22 = arith.mulf %17, %21 : vector<8x1xf32>
    %cst_8 = arith.constant 0.001953125 : f32
    %23 = vector.broadcast %cst_8 : f32 to vector<8x1xf32>
    %24 = arith.mulf %20, %23 : vector<8x1xf32>
    %25 = arith.mulf %22, %22 : vector<8x1xf32>
    %26 = arith.subf %24, %25 : vector<8x1xf32>
    %c0_9 = arith.constant 0 : index
    %c0_10 = arith.constant 0 : index
    %27 = vector.load %arg6[%c0_9, %c0_10] : memref<24x4xf32, #tpu.memory_space<vmem>>, vector<8x1xf32>
    %cst_11 = arith.constant 9.99999974E-6 : f32
    %28 = vector.broadcast %cst_11 : f32 to vector<8x1xf32>
    %29 = arith.addf %26, %28 : vector<8x1xf32>
    %30 = math.rsqrt %29 : vector<8x1xf32>
    %31 = arith.mulf %27, %30 : vector<8x1xf32>
    %c0_12 = arith.constant 0 : index
    %c1 = arith.constant 1 : index
    %32 = vector.load %arg6[%c0_12, %c1] : memref<24x4xf32, #tpu.memory_space<vmem>>, vector<8x1xf32>
    %33 = arith.mulf %22, %31 : vector<8x1xf32>
    %34 = arith.subf %32, %33 : vector<8x1xf32>
    %35 = vector.broadcast %31 : vector<8x1xf32> to vector<8x768xf32>
    %36 = arith.mulf %12, %35 : vector<8x768xf32>
    %37 = vector.broadcast %34 : vector<8x1xf32> to vector<8x768xf32>
    %38 = arith.addf %36, %37 : vector<8x768xf32>
    %cst_13 = arith.constant 0.000000e+00 : f32
    %39 = vector.broadcast %cst_13 : f32 to vector<8x768xf32>
    %40 = arith.maximumf %38, %39 : vector<8x768xf32>
    %c0_14 = arith.constant 0 : index
    %c0_15 = arith.constant 0 : index
    %41 = vector.load %arg7[%c0_14, %c0_15] : memref<24x384xi32, #tpu.memory_space<vmem>>, vector<1x384xi32>
    %42 = vector.extract_strided_slice %40 {offsets = [0, 0], sizes = [8, 632], strides = [1, 1]} : vector<8x768xf32> to vector<8x632xf32>
    %43 = vector.extract_strided_slice %40 {offsets = [0, 1], sizes = [8, 632], strides = [1, 1]} : vector<8x768xf32> to vector<8x632xf32>
    %44 = arith.maximumf %42, %43 : vector<8x632xf32>
    %45 = vector.extract_strided_slice %40 {offsets = [0, 18], sizes = [8, 632], strides = [1, 1]} : vector<8x768xf32> to vector<8x632xf32>
    %46 = vector.extract_strided_slice %40 {offsets = [0, 19], sizes = [8, 632], strides = [1, 1]} : vector<8x768xf32> to vector<8x632xf32>
    %47 = arith.maximumf %45, %46 : vector<8x632xf32>
    %48 = arith.maximumf %44, %47 : vector<8x632xf32>
    %49 = tpu.iota {dimensions = array<i32: 0>} : vector<632x384xi32>
    %50 = vector.broadcast %41 : vector<1x384xi32> to vector<632x384xi32>
    %51 = arith.cmpi eq, %49, %50 : vector<632x384xi32>
    %cst_16 = arith.constant 1.000000e+00 : f32
    %cst_17 = arith.constant 0.000000e+00 : f32
    %52 = vector.broadcast %cst_16 : f32 to vector<632x384xf32>
    %53 = vector.broadcast %cst_17 : f32 to vector<632x384xf32>
    %54 = arith.select %51, %52, %53 : vector<632x384xi1>, vector<632x384xf32>
    %cst_18 = arith.constant dense<0.000000e+00> : vector<8x384xf32>
    %55 = tpu.matmul %48, %54, %cst_18 {dimension_numbers = #tpu.dot_dimension_numbers<[1], [0], [0], [1], [0, 0, 1, 1], [], []>} : vector<8x632xf32>, vector<632x384xf32>, vector<8x384xf32> -> vector<8x384xf32>
    %c0_19 = arith.constant 0 : index
    %c0_20 = arith.constant 0 : index
    %56 = vector.load %arg4[%c0_19, %c0_20] : memref<16x72xf32, #tpu.memory_space<vmem>>, vector<16x72xf32>
    %57 = vector.extract_strided_slice %55 {offsets = [0, 0], sizes = [8, 256], strides = [1, 1]} : vector<8x384xf32> to vector<8x256xf32>
    %58 = vector.extract_strided_slice %55 {offsets = [0, 1], sizes = [8, 256], strides = [1, 1]} : vector<8x384xf32> to vector<8x256xf32>
    %59 = vector.extract_strided_slice %55 {offsets = [0, 2], sizes = [8, 256], strides = [1, 1]} : vector<8x384xf32> to vector<8x256xf32>
    %60 = vector.extract_strided_slice %55 {offsets = [0, 10], sizes = [8, 256], strides = [1, 1]} : vector<8x384xf32> to vector<8x256xf32>
    %61 = vector.extract_strided_slice %55 {offsets = [0, 11], sizes = [8, 256], strides = [1, 1]} : vector<8x384xf32> to vector<8x256xf32>
    %62 = vector.extract_strided_slice %55 {offsets = [0, 12], sizes = [8, 256], strides = [1, 1]} : vector<8x384xf32> to vector<8x256xf32>
    %63 = vector.extract_strided_slice %55 {offsets = [0, 20], sizes = [8, 256], strides = [1, 1]} : vector<8x384xf32> to vector<8x256xf32>
    %64 = vector.extract_strided_slice %55 {offsets = [0, 21], sizes = [8, 256], strides = [1, 1]} : vector<8x384xf32> to vector<8x256xf32>
    %65 = vector.extract_strided_slice %55 {offsets = [0, 22], sizes = [8, 256], strides = [1, 1]} : vector<8x384xf32> to vector<8x256xf32>
    %66 = tpu.concatenate %57, %58, %59, %60, %61, %62, %63, %64, %65 in 0 : vector<8x256xf32>, vector<8x256xf32>, vector<8x256xf32>, vector<8x256xf32>, vector<8x256xf32>, vector<8x256xf32>, vector<8x256xf32>, vector<8x256xf32>, vector<8x256xf32> -> vector<72x256xf32>
    %cst_21 = arith.constant dense<0.000000e+00> : vector<16x256xf32>
    %67 = tpu.matmul %56, %66, %cst_21 {dimension_numbers = #tpu.dot_dimension_numbers<[1], [0], [0], [1], [0, 0, 1, 1], [], []>} : vector<16x72xf32>, vector<72x256xf32>, vector<16x256xf32> -> vector<16x256xf32>
    %c0_22 = arith.constant 0 : index
    %c2 = arith.constant 2 : index
    %68 = vector.load %arg6[%c0_22, %c2] : memref<24x4xf32, #tpu.memory_space<vmem>>, vector<16x1xf32>
    %69 = vector.broadcast %68 : vector<16x1xf32> to vector<16x256xf32>
    %70 = arith.addf %67, %69 : vector<16x256xf32>
    %cst_23 = arith.constant 0.000000e+00 : f32
    %71 = vector.broadcast %cst_23 : f32 to vector<16x256xf32>
    %72 = arith.maximumf %70, %71 : vector<16x256xf32>
    %c8 = arith.constant 8 : index
    %c0_24 = arith.constant 0 : index
    %73 = vector.load %arg7[%c8, %c0_24] : memref<24x384xi32, #tpu.memory_space<vmem>>, vector<1x256xi32>
    %74 = vector.extract_strided_slice %72 {offsets = [0, 0], sizes = [16, 192], strides = [1, 1]} : vector<16x256xf32> to vector<16x192xf32>
    %75 = vector.extract_strided_slice %72 {offsets = [0, 1], sizes = [16, 192], strides = [1, 1]} : vector<16x256xf32> to vector<16x192xf32>
    %76 = arith.maximumf %74, %75 : vector<16x192xf32>
    %77 = vector.extract_strided_slice %72 {offsets = [0, 10], sizes = [16, 192], strides = [1, 1]} : vector<16x256xf32> to vector<16x192xf32>
    %78 = vector.extract_strided_slice %72 {offsets = [0, 11], sizes = [16, 192], strides = [1, 1]} : vector<16x256xf32> to vector<16x192xf32>
    %79 = arith.maximumf %77, %78 : vector<16x192xf32>
    %80 = arith.maximumf %76, %79 : vector<16x192xf32>
    %81 = tpu.iota {dimensions = array<i32: 0>} : vector<192x256xi32>
    %82 = vector.broadcast %73 : vector<1x256xi32> to vector<192x256xi32>
    %83 = arith.cmpi eq, %81, %82 : vector<192x256xi32>
    %cst_25 = arith.constant 1.000000e+00 : f32
    %cst_26 = arith.constant 0.000000e+00 : f32
    %84 = vector.broadcast %cst_25 : f32 to vector<192x256xf32>
    %85 = vector.broadcast %cst_26 : f32 to vector<192x256xf32>
    %86 = arith.select %83, %84, %85 : vector<192x256xi1>, vector<192x256xf32>
    %cst_27 = arith.constant dense<0.000000e+00> : vector<16x256xf32>
    %87 = tpu.matmul %80, %86, %cst_27 {dimension_numbers = #tpu.dot_dimension_numbers<[1], [0], [0], [1], [0, 0, 1, 1], [], []>} : vector<16x192xf32>, vector<192x256xf32>, vector<16x256xf32> -> vector<16x256xf32>
    %c0_28 = arith.constant 0 : index
    %c0_29 = arith.constant 0 : index
    %88 = vector.load %arg5[%c0_28, %c0_29] : memref<24x144xf32, #tpu.memory_space<vmem>>, vector<24x144xf32>
    %89 = vector.extract_strided_slice %87 {offsets = [0, 0], sizes = [16, 128], strides = [1, 1]} : vector<16x256xf32> to vector<16x128xf32>
    %90 = vector.extract_strided_slice %87 {offsets = [0, 1], sizes = [16, 128], strides = [1, 1]} : vector<16x256xf32> to vector<16x128xf32>
    %91 = vector.extract_strided_slice %87 {offsets = [0, 2], sizes = [16, 128], strides = [1, 1]} : vector<16x256xf32> to vector<16x128xf32>
    %92 = vector.extract_strided_slice %87 {offsets = [0, 6], sizes = [16, 128], strides = [1, 1]} : vector<16x256xf32> to vector<16x128xf32>
    %93 = vector.extract_strided_slice %87 {offsets = [0, 7], sizes = [16, 128], strides = [1, 1]} : vector<16x256xf32> to vector<16x128xf32>
    %94 = vector.extract_strided_slice %87 {offsets = [0, 8], sizes = [16, 128], strides = [1, 1]} : vector<16x256xf32> to vector<16x128xf32>
    %95 = vector.extract_strided_slice %87 {offsets = [0, 12], sizes = [16, 128], strides = [1, 1]} : vector<16x256xf32> to vector<16x128xf32>
    %96 = vector.extract_strided_slice %87 {offsets = [0, 13], sizes = [16, 128], strides = [1, 1]} : vector<16x256xf32> to vector<16x128xf32>
    %97 = vector.extract_strided_slice %87 {offsets = [0, 14], sizes = [16, 128], strides = [1, 1]} : vector<16x256xf32> to vector<16x128xf32>
    %98 = tpu.concatenate %89, %90, %91, %92, %93, %94, %95, %96, %97 in 0 : vector<16x128xf32>, vector<16x128xf32>, vector<16x128xf32>, vector<16x128xf32>, vector<16x128xf32>, vector<16x128xf32>, vector<16x128xf32>, vector<16x128xf32>, vector<16x128xf32> -> vector<144x128xf32>
    %cst_30 = arith.constant dense<0.000000e+00> : vector<24x128xf32>
    %99 = tpu.matmul %88, %98, %cst_30 {dimension_numbers = #tpu.dot_dimension_numbers<[1], [0], [0], [1], [0, 0, 1, 1], [], []>} : vector<24x144xf32>, vector<144x128xf32>, vector<24x128xf32> -> vector<24x128xf32>
    %c0_31 = arith.constant 0 : index
    %c3 = arith.constant 3 : index
    %100 = vector.load %arg6[%c0_31, %c3] : memref<24x4xf32, #tpu.memory_space<vmem>>, vector<24x1xf32>
    %101 = vector.broadcast %100 : vector<24x1xf32> to vector<24x128xf32>
    %102 = arith.addf %99, %101 : vector<24x128xf32>
    %cst_32 = arith.constant 0.000000e+00 : f32
    %103 = vector.broadcast %cst_32 : f32 to vector<24x128xf32>
    %104 = arith.maximumf %102, %103 : vector<24x128xf32>
    %c16 = arith.constant 16 : index
    %c0_33 = arith.constant 0 : index
    %105 = vector.load %arg7[%c16, %c0_33] : memref<24x384xi32, #tpu.memory_space<vmem>>, vector<1x128xi32>
    %106 = vector.extract_strided_slice %104 {offsets = [0, 0], sizes = [24, 72], strides = [1, 1]} : vector<24x128xf32> to vector<24x72xf32>
    %107 = vector.extract_strided_slice %104 {offsets = [0, 1], sizes = [24, 72], strides = [1, 1]} : vector<24x128xf32> to vector<24x72xf32>
    %108 = arith.maximumf %106, %107 : vector<24x72xf32>
    %109 = vector.extract_strided_slice %104 {offsets = [0, 6], sizes = [24, 72], strides = [1, 1]} : vector<24x128xf32> to vector<24x72xf32>
    %110 = vector.extract_strided_slice %104 {offsets = [0, 7], sizes = [24, 72], strides = [1, 1]} : vector<24x128xf32> to vector<24x72xf32>
    %111 = arith.maximumf %109, %110 : vector<24x72xf32>
    %112 = arith.maximumf %108, %111 : vector<24x72xf32>
    %113 = tpu.iota {dimensions = array<i32: 0>} : vector<72x128xi32>
    %114 = vector.broadcast %105 : vector<1x128xi32> to vector<72x128xi32>
    %115 = arith.cmpi eq, %113, %114 : vector<72x128xi32>
    %cst_34 = arith.constant 1.000000e+00 : f32
    %cst_35 = arith.constant 0.000000e+00 : f32
    %116 = vector.broadcast %cst_34 : f32 to vector<72x128xf32>
    %117 = vector.broadcast %cst_35 : f32 to vector<72x128xf32>
    %118 = arith.select %115, %116, %117 : vector<72x128xi1>, vector<72x128xf32>
    %cst_36 = arith.constant dense<0.000000e+00> : vector<24x128xf32>
    %119 = tpu.matmul %112, %118, %cst_36 {dimension_numbers = #tpu.dot_dimension_numbers<[1], [0], [0], [1], [0, 0, 1, 1], [], []>} : vector<24x72xf32>, vector<72x128xf32>, vector<24x128xf32> -> vector<24x128xf32>
    %c0_37 = arith.constant 0 : index
    %c0_38 = arith.constant 0 : index
    %120 = vector.load %arg8[%c0_37, %c0_38] : memref<24x128xf32, #tpu.memory_space<vmem>>, vector<24x128xf32>
    tpu.vector_store %arg8[%c0_37, %c0_38], %119 {strides = array<i32>} : memref<24x128xf32, #tpu.memory_space<vmem>>, vector<24x128xf32>,
    return
  }
  func.func @transform_0(%arg0: i32) -> (i32, i32) {
    %c0_i32 = arith.constant 0 : i32
    %c0_i32_0 = arith.constant 0 : i32
    %c0_i32_1 = arith.constant 0 : i32
    return %c0_i32, %c0_i32_0 : i32, i32
  }
  func.func @transform_1(%arg0: i32) -> (i32, i32) {
    %c0_i32 = arith.constant 0 : i32
    %c0_i32_0 = arith.constant 0 : i32
    %c0_i32_1 = arith.constant 0 : i32
    return %c0_i32, %c0_i32_0 : i32, i32
  }
  func.func @transform_2(%arg0: i32) -> (i32, i32) {
    %c0_i32 = arith.constant 0 : i32
    %c0_i32_0 = arith.constant 0 : i32
    %c0_i32_1 = arith.constant 0 : i32
    return %c0_i32, %c0_i32_0 : i32, i32
  }
  func.func @transform_3(%arg0: i32) -> (i32, i32) {
    %c0_i32 = arith.constant 0 : i32
    %c0_i32_0 = arith.constant 0 : i32
    %c0_i32_1 = arith.constant 0 : i32
    return %c0_i32, %c0_i32_0 : i32, i32
  }
  func.func @transform_4(%arg0: i32) -> (i32, i32) {
    %c0_i32 = arith.constant 0 : i32
    %c0_i32_0 = arith.constant 0 : i32
    %c0_i32_1 = arith.constant 0 : i32
    return %c0_i32, %c0_i32_0 : i32, i32
  }
  func.func @transform_5(%arg0: i32) -> (i32, i32) {
    %c0_i32 = arith.constant 0 : i32
    %c0_i32_0 = arith.constant 0 : i32
    %c0_i32_1 = arith.constant 0 : i32
    return %c0_i32, %c0_i32_0 : i32, i32
  }
  func.func @transform_6(%arg0: i32) -> (i32, i32) {
    %c0_i32 = arith.constant 0 : i32
    %c0_i32_0 = arith.constant 0 : i32
    %c0_i32_1 = arith.constant 0 : i32
    return %c0_i32, %c0_i32_0 : i32, i32
  }
  func.func @transform_7(%arg0: i32) -> (i32, i32) {
    %c0_i32 = arith.constant 0 : i32
    %c0_i32_0 = arith.constant 0 : i32
    %c0_i32_1 = arith.constant 0 : i32
    return %c0_i32, %c0_i32_0 : i32, i32
  }
}

</mosaic_0001>

<llo_original>
// kernel: fe_cnn_2_forward.1
$region0: #{fe_cnn_2_forward.1}
  #allocation0 [shape = 'u32[]', space=smem, size = 0x4, offset = 0x4, fixed_abs, tag = 'smem constant byte address 0x4 - core index']
  #allocation1 [shape = 'u32[144,128]{1,0:T(1,128)}', space=vmem, size = 0x12000, scoped, tag = 'internal scratch']
  %s0 = inlined_call_operand.vmem [shape: f32[8,896], index: 0, kind: input, shape index: {}]
  %s1 = inlined_call_operand.vmem [shape: f32[1,768], index: 1, kind: input, shape index: {}]
  %s2 = inlined_call_operand.vmem [shape: f32[8,72], index: 2, kind: input, shape index: {}]
  %s3 = inlined_call_operand.vmem [shape: f32[16,72], index: 3, kind: input, shape index: {}]
  %s4 = inlined_call_operand.vmem [shape: f32[24,144], index: 4, kind: input, shape index: {}]
  %s5 = inlined_call_operand.vmem [shape: f32[24,4], index: 5, kind: input, shape index: {}]
  %s6 = inlined_call_operand.vmem [shape: s32[24,384], index: 6, kind: input, shape index: {}]
  %s7 = inlined_call_operand.vmem [shape: f32[24,128], index: 7, kind: output, shape index: {}]
  %s8 = sld [smem:[#allocation0]]
  $region38: #{fe_cnn_2_forward.1} parent=0
    _
  %s10 = ssub.s32 1, %s8
  %s11 = scalar_select 0, %s10, %s8
  // Predicated region
  $region2: #{fe_cnn_2_forward.1} parent=0 // pred_check
    _
  $region3: #{fe_cnn_2_forward.1} parent=0 // pred_check_branch
    %13 = sbr.rel (0) target = $region5
  $region4: #{fe_cnn_2_forward.1} parent=0 // pred_region
    _
  $region5: #{fe_cnn_2_forward.1} parent=0 // pred_fallthru
    _
  // Predicated region
  $region6: #{fe_cnn_2_forward.1} parent=0 // pred_check
    _
  $region7: #{fe_cnn_2_forward.1} parent=0 // pred_check_branch
    %15 = sbr.rel (0) target = $region9
  $region8: #{fe_cnn_2_forward.1} parent=0 // pred_region
    _
  $region9: #{fe_cnn_2_forward.1} parent=0 // pred_fallthru
    _
  // Predicated region
  $region10: #{fe_cnn_2_forward.1} parent=0 // pred_check
    _
  $region11: #{fe_cnn_2_forward.1} parent=0 // pred_check_branch
    %17 = sbr.rel (0) target = $region13
  $region12: #{fe_cnn_2_forward.1} parent=0 // pred_region
    _
  $region13: #{fe_cnn_2_forward.1} parent=0 // pred_fallthru
    _
  // Predicated region
  $region14: #{fe_cnn_2_forward.1} parent=0 // pred_check
    _
  $region15: #{fe_cnn_2_forward.1} parent=0 // pred_check_branch
    %19 = sbr.rel (0) target = $region17
  $region16: #{fe_cnn_2_forward.1} parent=0 // pred_region
    _
  $region17: #{fe_cnn_2_forward.1} parent=0 // pred_fallthru
    _
  // Predicated region
  $region18: #{fe_cnn_2_forward.1} parent=0 // pred_check
    _
  $region19: #{fe_cnn_2_forward.1} parent=0 // pred_check_branch
    %21 = sbr.rel (0) target = $region21
  $region20: #{fe_cnn_2_forward.1} parent=0 // pred_region
    _
  $region21: #{fe_cnn_2_forward.1} parent=0 // pred_fallthru
    _
  // Predicated region
  $region22: #{fe_cnn_2_forward.1} parent=0 // pred_check
    _
  $region23: #{fe_cnn_2_forward.1} parent=0 // pred_check_branch
    %23 = sbr.rel (0) target = $region25
  $region24: #{fe_cnn_2_forward.1} parent=0 // pred_region
    _
  $region25: #{fe_cnn_2_forward.1} parent=0 // pred_fallthru
    _
  // Predicated region
  $region26: #{fe_cnn_2_forward.1} parent=0 // pred_check
    _
  $region27: #{fe_cnn_2_forward.1} parent=0 // pred_check_branch
    %25 = sbr.rel (0) target = $region29
  $region28: #{fe_cnn_2_forward.1} parent=0 // pred_region
    _
  $region29: #{fe_cnn_2_forward.1} parent=0 // pred_fallthru
    _
  %v26 = vld [vmem:[%s0] sm:$0xff]
  %v27 = vld [vmem:[%s0 + $0x8] sm:$0xff]
  %v28 = vld [vmem:[%s0 + $0x10] sm:$0xff]
  %v29 = vld [vmem:[%s0 + $0x18] sm:$0xff]
  %v30 = vld [vmem:[%s0 + $0x20] sm:$0xff]
  %v31 = vld [vmem:[%s0 + $0x28] sm:$0xff]
  %v32 = vld [vmem:[%s0 + $0x30] sm:$0xff]
  %v33 = vld [vmem:[%s2] sm:$0xff]
  %41 = vrot.lane.b32.xlu0 %v26, 127
  %v42 = vpop.permute.xlu0 %41
  %43 = vrot.lane.b32.xlu0 %v27, 127
  %v44 = vpop.permute.xlu0 %43
  %45 = vrot.lane.b32.xlu0 %v28, 127
  %v46 = vpop.permute.xlu0 %45
  %47 = vrot.lane.b32.xlu0 %v29, 127
  %v48 = vpop.permute.xlu0 %47
  %49 = vrot.lane.b32.xlu0 %v30, 127
  %v50 = vpop.permute.xlu0 %49
  %51 = vrot.lane.b32.xlu0 %v31, 127
  %v52 = vpop.permute.xlu0 %51
  %53 = vrot.lane.b32.xlu0 %v32, 127
  %v54 = vpop.permute.xlu0 %53
  %vm55 = vcmask 1039360
  %v56 = vsel %vm55, %v42, %v44
  %v57 = vsel %vm55, %v44, %v46
  %v58 = vsel %vm55, %v46, %v48
  %v59 = vsel %vm55, %v48, %v50
  %v60 = vsel %vm55, %v50, %v52
  %v61 = vsel %vm55, %v52, %v54
  %68 = vrot.lane.b32.xlu0 %v26, 126
  %v69 = vpop.permute.xlu0 %68
  %70 = vrot.lane.b32.xlu0 %v27, 126
  %v71 = vpop.permute.xlu0 %70
  %72 = vrot.lane.b32.xlu0 %v28, 126
  %v73 = vpop.permute.xlu0 %72
  %74 = vrot.lane.b32.xlu0 %v29, 126
  %v75 = vpop.permute.xlu0 %74
  %76 = vrot.lane.b32.xlu0 %v30, 126
  %v77 = vpop.permute.xlu0 %76
  %78 = vrot.lane.b32.xlu0 %v31, 126
  %v79 = vpop.permute.xlu0 %78
  %80 = vrot.lane.b32.xlu0 %v32, 126
  %v81 = vpop.permute.xlu0 %80
  %vm82 = vcmask 1031168
  %v83 = vsel %vm82, %v69, %v71
  %v84 = vsel %vm82, %v71, %v73
  %v85 = vsel %vm82, %v73, %v75
  %v86 = vsel %vm82, %v75, %v77
  %v87 = vsel %vm82, %v77, %v79
  %v88 = vsel %vm82, %v79, %v81
  %95 = vrot.lane.b32.xlu0 %v26, 110
  %v96 = vpop.permute.xlu0 %95
  %97 = vrot.lane.b32.xlu0 %v27, 110
  %v98 = vpop.permute.xlu0 %97
  %99 = vrot.lane.b32.xlu0 %v28, 110
  %v100 = vpop.permute.xlu0 %99
  %101 = vrot.lane.b32.xlu0 %v29, 110
  %v102 = vpop.permute.xlu0 %101
  %103 = vrot.lane.b32.xlu0 %v30, 110
  %v104 = vpop.permute.xlu0 %103
  %105 = vrot.lane.b32.xlu0 %v31, 110
  %v106 = vpop.permute.xlu0 %105
  %107 = vrot.lane.b32.xlu0 %v32, 110
  %v108 = vpop.permute.xlu0 %107
  %vm109 = vcmask 900096
  %v110 = vsel %vm109, %v96, %v98
  %v111 = vsel %vm109, %v98, %v100
  %v112 = vsel %vm109, %v100, %v102
  %v113 = vsel %vm109, %v102, %v104
  %v114 = vsel %vm109, %v104, %v106
  %v115 = vsel %vm109, %v106, %v108
  %122 = vrot.lane.b32.xlu0 %v26, 109
  %v123 = vpop.permute.xlu0 %122
  %124 = vrot.lane.b32.xlu0 %v27, 109
  %v125 = vpop.permute.xlu0 %124
  %126 = vrot.lane.b32.xlu0 %v28, 109
  %v127 = vpop.permute.xlu0 %126
  %128 = vrot.lane.b32.xlu0 %v29, 109
  %v129 = vpop.permute.xlu0 %128
  %130 = vrot.lane.b32.xlu0 %v30, 109
  %v131 = vpop.permute.xlu0 %130
  %132 = vrot.lane.b32.xlu0 %v31, 109
  %v133 = vpop.permute.xlu0 %132
  %134 = vrot.lane.b32.xlu0 %v32, 109
  %v135 = vpop.permute.xlu0 %134
  %vm136 = vcmask 891904
  %v137 = vsel %vm136, %v123, %v125
  %v138 = vsel %vm136, %v125, %v127
  %v139 = vsel %vm136, %v127, %v129
  %v140 = vsel %vm136, %v129, %v131
  %v141 = vsel %vm136, %v131, %v133
  %v142 = vsel %vm136, %v133, %v135
  %149 = vrot.lane.b32.xlu0 %v26, 108
  %v150 = vpop.permute.xlu0 %149
  %151 = vrot.lane.b32.xlu0 %v27, 108
  %v152 = vpop.permute.xlu0 %151
  %153 = vrot.lane.b32.xlu0 %v28, 108
  %v154 = vpop.permute.xlu0 %153
  %155 = vrot.lane.b32.xlu0 %v29, 108
  %v156 = vpop.permute.xlu0 %155
  %157 = vrot.lane.b32.xlu0 %v30, 108
  %v158 = vpop.permute.xlu0 %157
  %159 = vrot.lane.b32.xlu0 %v31, 108
  %v160 = vpop.permute.xlu0 %159
  %161 = vrot.lane.b32.xlu0 %v32, 108
  %v162 = vpop.permute.xlu0 %161
  %vm163 = vcmask 883712
  %v164 = vsel %vm163, %v150, %v152
  %v165 = vsel %vm163, %v152, %v154
  %v166 = vsel %vm163, %v154, %v156
  %v167 = vsel %vm163, %v156, %v158
  %v168 = vsel %vm163, %v158, %v160
  %v169 = vsel %vm163, %v160, %v162
  %176 = vrot.lane.b32.xlu0 %v26, 92
  %v177 = vpop.permute.xlu0 %176
  %178 = vrot.lane.b32.xlu0 %v27, 92
  %v179 = vpop.permute.xlu0 %178
  %180 = vrot.lane.b32.xlu0 %v28, 92
  %v181 = vpop.permute.xlu0 %180
  %182 = vrot.lane.b32.xlu0 %v29, 92
  %v183 = vpop.permute.xlu0 %182
  %184 = vrot.lane.b32.xlu0 %v30, 92
  %v185 = vpop.permute.xlu0 %184
  %186 = vrot.lane.b32.xlu0 %v31, 92
  %v187 = vpop.permute.xlu0 %186
  %188 = vrot.lane.b32.xlu0 %v32, 92
  %v189 = vpop.permute.xlu0 %188
  %vm190 = vcmask 752640
  %v191 = vsel %vm190, %v177, %v179
  %v192 = vsel %vm190, %v179, %v181
  %v193 = vsel %vm190, %v181, %v183
  %v194 = vsel %vm190, %v183, %v185
  %v195 = vsel %vm190, %v185, %v187
  %v196 = vsel %vm190, %v187, %v189
  %203 = vrot.lane.b32.xlu0 %v26, 91
  %v204 = vpop.permute.xlu0 %203
  %205 = vrot.lane.b32.xlu0 %v27, 91
  %v206 = vpop.permute.xlu0 %205
  %207 = vrot.lane.b32.xlu0 %v28, 91
  %v208 = vpop.permute.xlu0 %207
  %209 = vrot.lane.b32.xlu0 %v29, 91
  %v210 = vpop.permute.xlu0 %209
  %211 = vrot.lane.b32.xlu0 %v30, 91
  %v212 = vpop.permute.xlu0 %211
  %213 = vrot.lane.b32.xlu0 %v31, 91
  %v214 = vpop.permute.xlu0 %213
  %215 = vrot.lane.b32.xlu0 %v32, 91
  %v216 = vpop.permute.xlu0 %215
  %vm217 = vcmask 744448
  %v218 = vsel %vm217, %v204, %v206
  %v219 = vsel %vm217, %v206, %v208
  %v220 = vsel %vm217, %v208, %v210
  %v221 = vsel %vm217, %v210, %v212
  %v222 = vsel %vm217, %v212, %v214
  %v223 = vsel %vm217, %v214, %v216
  %230 = vrot.lane.b32.xlu0 %v26, 90
  %v231 = vpop.permute.xlu0 %230
  %232 = vrot.lane.b32.xlu0 %v27, 90
  %v233 = vpop.permute.xlu0 %232
  %234 = vrot.lane.b32.xlu0 %v28, 90
  %v235 = vpop.permute.xlu0 %234
  %236 = vrot.lane.b32.xlu0 %v29, 90
  %v237 = vpop.permute.xlu0 %236
  %238 = vrot.lane.b32.xlu0 %v30, 90
  %v239 = vpop.permute.xlu0 %238
  %240 = vrot.lane.b32.xlu0 %v31, 90
  %v241 = vpop.permute.xlu0 %240
  %242 = vrot.lane.b32.xlu0 %v32, 90
  %v243 = vpop.permute.xlu0 %242
  %vm244 = vcmask 736256
  %v245 = vsel %vm244, %v231, %v233
  %v246 = vsel %vm244, %v233, %v235
  %v247 = vsel %vm244, %v235, %v237
  %v248 = vsel %vm244, %v237, %v239
  %v249 = vsel %vm244, %v239, %v241
  %v250 = vsel %vm244, %v241, %v243
  %vm257 = vcmask 588800
  %v259 = vsel %vm257, %v33, 0
  %261 = vmatprep.subr.mxu0 0.0
  %262 = vmatpush1.msra.mxu0 0.0
  %263 = vmatprep.subr.mxu0 0.0
  %264 = vmatpush1.msra.mxu0 0.0
  %265 = vmatprep.subr.mxu0 0.0
  %266 = vmatpush1.msra.mxu0 0.0
  %267 = vmatprep.subr.mxu0 0.0
  %268 = vmatpush1.msra.mxu0 0.0
  %269 = vmatprep.subr.mxu0 0.0
  %270 = vmatpush1.msra.mxu0 0.0
  %271 = vmatprep.subr.mxu0 0.0
  %272 = vmatpush1.msra.mxu0 0.0
  %273 = vmatprep.subr.mxu0 0.0
  %274 = vmatpush1.msra.mxu0 0.0
  %275 = vmatprep.subr.mxu0 %v246
  %276 = vmatpush1.msra.mxu0 %v245
  %277 = vmatprep.subr.mxu0 %v219
  %278 = vmatpush1.msra.mxu0 %v218
  %279 = vmatprep.subr.mxu0 %v192
  %280 = vmatpush1.msra.mxu0 %v191
  %281 = vmatprep.subr.mxu0 %v165
  %282 = vmatpush1.msra.mxu0 %v164
  %283 = vmatprep.subr.mxu0 %v138
  %284 = vmatpush1.msra.mxu0 %v137
  %285 = vmatprep.subr.mxu0 %v111
  %286 = vmatpush1.msra.mxu0 %v110
  %287 = vmatprep.subr.mxu0 %v84
  %288 = vmatpush1.msra.mxu0 %v83
  %289 = vmatprep.subr.mxu0 %v57
  %290 = vmatpush1.msra.mxu0 %v56
  %291 = vmatprep.subr.mxu0 %v27
  %292 = vmatpush1.msra.mxu0 %v26
  %293 = vmatprep.subr.mxu0 0.0
  %294 = vmatpush2.msra.mxu0 0.0
  %295 = vmatprep.subr.mxu0 0.0
  %296 = vmatpush2.msra.mxu0 0.0
  %297 = vmatprep.subr.mxu0 0.0
  %298 = vmatpush2.msra.mxu0 0.0
  %299 = vmatprep.subr.mxu0 0.0
  %300 = vmatpush2.msra.mxu0 0.0
  %301 = vmatprep.subr.mxu0 0.0
  %302 = vmatpush2.msra.mxu0 0.0
  %303 = vmatprep.subr.mxu0 0.0
  %304 = vmatpush2.msra.mxu0 0.0
  %305 = vmatprep.subr.mxu0 0.0
  %306 = vmatpush2.msra.mxu0 0.0
  %307 = vmatprep.subr.mxu0 0.0
  %308 = vmatpush2.msra.mxu0 0.0
  %309 = vmatprep.subr.mxu0 0.0
  %310 = vmatpush2.msra.mxu0 0.0
  %311 = vmatprep.subr.mxu0 0.0
  %312 = vmatpush2.msra.mxu0 0.0
  %313 = vmatprep.subr.mxu0 0.0
  %314 = vmatpush2.msra.mxu0 0.0
  %315 = vmatprep.subr.mxu0 0.0
  %316 = vmatpush2.msra.mxu0 0.0
  %317 = vmatprep.subr.mxu0 0.0
  %318 = vmatpush2.msra.mxu0 0.0
  %319 = vmatprep.subr.mxu0 0.0
  %320 = vmatpush2.msra.mxu0 0.0
  %321 = vmatprep.subr.mxu0 0.0
  %322 = vmatpush2.msra.mxu0 0.0
  %323 = vmatprep.subr.mxu0 0.0
  %324 = vmatpush2.msra.mxu0 0.0
  %325 = vmatprep.mubr.f32.mxu0 0.0
  %326 = vmatmul.mubr.f32.gmra.mxu0 %v259
  %v327 = vpop.f32.mrf.mxu0
  %v328 = vadd.f32 0.0, %v327
  %v329 = vpop.f32.mrf.mxu0
  %v330 = vadd.f32 0.0, %v329
  %331 = vdwg.mxu0
  %332 = vmatprep.subr.mxu0 0.0
  %333 = vmatpush1.msra.mxu0 0.0
  %334 = vmatprep.subr.mxu0 0.0
  %335 = vmatpush1.msra.mxu0 0.0
  %336 = vmatprep.subr.mxu0 0.0
  %337 = vmatpush1.msra.mxu0 0.0
  %338 = vmatprep.subr.mxu0 0.0
  %339 = vmatpush1.msra.mxu0 0.0
  %340 = vmatprep.subr.mxu0 0.0
  %341 = vmatpush1.msra.mxu0 0.0
  %342 = vmatprep.subr.mxu0 0.0
  %343 = vmatpush1.msra.mxu0 0.0
  %344 = vmatprep.subr.mxu0 0.0
  %345 = vmatpush1.msra.mxu0 0.0
  %346 = vmatprep.subr.mxu0 %v248
  %347 = vmatpush1.msra.mxu0 %v247
  %348 = vmatprep.subr.mxu0 %v221
  %349 = vmatpush1.msra.mxu0 %v220
  %350 = vmatprep.subr.mxu0 %v194
  %351 = vmatpush1.msra.mxu0 %v193
  %352 = vmatprep.subr.mxu0 %v167
  %353 = vmatpush1.msra.mxu0 %v166
  %354 = vmatprep.subr.mxu0 %v140
  %355 = vmatpush1.msra.mxu0 %v139
  %356 = vmatprep.subr.mxu0 %v113
  %357 = vmatpush1.msra.mxu0 %v112
  %358 = vmatprep.subr.mxu0 %v86
  %359 = vmatpush1.msra.mxu0 %v85
  %360 = vmatprep.subr.mxu0 %v59
  %361 = vmatpush1.msra.mxu0 %v58
  %362 = vmatprep.subr.mxu0 %v29
  %363 = vmatpush1.msra.mxu0 %v28
  %364 = vmatprep.subr.mxu0 0.0
  %365 = vmatpush2.msra.mxu0 0.0
  %366 = vmatprep.subr.mxu0 0.0
  %367 = vmatpush2.msra.mxu0 0.0
  %368 = vmatprep.subr.mxu0 0.0
  %369 = vmatpush2.msra.mxu0 0.0
  %370 = vmatprep.subr.mxu0 0.0
  %371 = vmatpush2.msra.mxu0 0.0
  %372 = vmatprep.subr.mxu0 0.0
  %373 = vmatpush2.msra.mxu0 0.0
  %374 = vmatprep.subr.mxu0 0.0
  %375 = vmatpush2.msra.mxu0 0.0
  %376 = vmatprep.subr.mxu0 0.0
  %377 = vmatpush2.msra.mxu0 0.0
  %378 = vmatprep.subr.mxu0 0.0
  %379 = vmatpush2.msra.mxu0 0.0
  %380 = vmatprep.subr.mxu0 0.0
  %381 = vmatpush2.msra.mxu0 0.0
  %382 = vmatprep.subr.mxu0 0.0
  %383 = vmatpush2.msra.mxu0 0.0
  %384 = vmatprep.subr.mxu0 0.0
  %385 = vmatpush2.msra.mxu0 0.0
  %386 = vmatprep.subr.mxu0 0.0
  %387 = vmatpush2.msra.mxu0 0.0
  %388 = vmatprep.subr.mxu0 0.0
  %389 = vmatpush2.msra.mxu0 0.0
  %390 = vmatprep.subr.mxu0 0.0
  %391 = vmatpush2.msra.mxu0 0.0
  %392 = vmatprep.subr.mxu0 0.0
  %393 = vmatpush2.msra.mxu0 0.0
  %394 = vmatprep.subr.mxu0 0.0
  %395 = vmatpush2.msra.mxu0 0.0
  %396 = vmatprep.mubr.f32.mxu0 0.0
  %397 = vmatmul.mubr.f32.gmra.mxu0 %v259
  %v398 = vpop.f32.mrf.mxu0
  %v399 = vadd.f32 0.0, %v398
  %v400 = vpop.f32.mrf.mxu0
  %v401 = vadd.f32 0.0, %v400
  %402 = vdwg.mxu0
  %403 = vmatprep.subr.mxu0 0.0
  %404 = vmatpush1.msra.mxu0 0.0
  %405 = vmatprep.subr.mxu0 0.0
  %406 = vmatpush1.msra.mxu0 0.0
  %407 = vmatprep.subr.mxu0 0.0
  %408 = vmatpush1.msra.mxu0 0.0
  %409 = vmatprep.subr.mxu0 0.0
  %410 = vmatpush1.msra.mxu0 0.0
  %411 = vmatprep.subr.mxu0 0.0
  %412 = vmatpush1.msra.mxu0 0.0
  %413 = vmatprep.subr.mxu0 0.0
  %414 = vmatpush1.msra.mxu0 0.0
  %415 = vmatprep.subr.mxu0 0.0
  %416 = vmatpush1.msra.mxu0 0.0
  %417 = vmatprep.subr.mxu0 %v250
  %418 = vmatpush1.msra.mxu0 %v249
  %419 = vmatprep.subr.mxu0 %v223
  %420 = vmatpush1.msra.mxu0 %v222
  %421 = vmatprep.subr.mxu0 %v196
  %422 = vmatpush1.msra.mxu0 %v195
  %423 = vmatprep.subr.mxu0 %v169
  %424 = vmatpush1.msra.mxu0 %v168
  %425 = vmatprep.subr.mxu0 %v142
  %426 = vmatpush1.msra.mxu0 %v141
  %427 = vmatprep.subr.mxu0 %v115
  %428 = vmatpush1.msra.mxu0 %v114
  %429 = vmatprep.subr.mxu0 %v88
  %430 = vmatpush1.msra.mxu0 %v87
  %431 = vmatprep.subr.mxu0 %v61
  %432 = vmatpush1.msra.mxu0 %v60
  %433 = vmatprep.subr.mxu0 %v31
  %434 = vmatpush1.msra.mxu0 %v30
  %435 = vmatprep.subr.mxu0 0.0
  %436 = vmatpush2.msra.mxu0 0.0
  %437 = vmatprep.subr.mxu0 0.0
  %438 = vmatpush2.msra.mxu0 0.0
  %439 = vmatprep.subr.mxu0 0.0
  %440 = vmatpush2.msra.mxu0 0.0
  %441 = vmatprep.subr.mxu0 0.0
  %442 = vmatpush2.msra.mxu0 0.0
  %443 = vmatprep.subr.mxu0 0.0
  %444 = vmatpush2.msra.mxu0 0.0
  %445 = vmatprep.subr.mxu0 0.0
  %446 = vmatpush2.msra.mxu0 0.0
  %447 = vmatprep.subr.mxu0 0.0
  %448 = vmatpush2.msra.mxu0 0.0
  %449 = vmatprep.subr.mxu0 0.0
  %450 = vmatpush2.msra.mxu0 0.0
  %451 = vmatprep.subr.mxu0 0.0
  %452 = vmatpush2.msra.mxu0 0.0
  %453 = vmatprep.subr.mxu0 0.0
  %454 = vmatpush2.msra.mxu0 0.0
  %455 = vmatprep.subr.mxu0 0.0
  %456 = vmatpush2.msra.mxu0 0.0
  %457 = vmatprep.subr.mxu0 0.0
  %458 = vmatpush2.msra.mxu0 0.0
  %459 = vmatprep.subr.mxu0 0.0
  %460 = vmatpush2.msra.mxu0 0.0
  %461 = vmatprep.subr.mxu0 0.0
  %462 = vmatpush2.msra.mxu0 0.0
  %463 = vmatprep.subr.mxu0 0.0
  %464 = vmatpush2.msra.mxu0 0.0
  %465 = vmatprep.subr.mxu0 0.0
  %466 = vmatpush2.msra.mxu0 0.0
  %467 = vmatprep.mubr.f32.mxu0 0.0
  %468 = vmatmul.mubr.f32.gmra.mxu0 %v259
  %v469 = vpop.f32.mrf.mxu0
  %v470 = vadd.f32 0.0, %v469
  %v471 = vpop.f32.mrf.mxu0
  %v472 = vadd.f32 0.0, %v471
  %473 = vdwg.mxu0
  %v474 = vld [vmem:[%s1] sm:$0x3f]
  %v476 = vlaneseq
  %v477 = vshrl.u32 %v476, 7
  %v478 = vsub.s32 0, %v477
  %v479 = vrot.slane %v474, %v478
  %v480 = vlaneseq
  %v481 = vshrl.u32 %v480, 7
  %v482 = vsub.s32 1, %v481
  %v483 = vrot.slane %v474, %v482
  %v484 = vlaneseq
  %v485 = vshrl.u32 %v484, 7
  %v486 = vsub.s32 2, %v485
  %v487 = vrot.slane %v474, %v486
  %v488 = vlaneseq
  %v489 = vshrl.u32 %v488, 7
  %v490 = vsub.s32 3, %v489
  %v491 = vrot.slane %v474, %v490
  %v492 = vlaneseq
  %v493 = vshrl.u32 %v492, 7
  %v494 = vsub.s32 4, %v493
  %v495 = vrot.slane %v474, %v494
  %v496 = vlaneseq
  %v497 = vshrl.u32 %v496, 7
  %v498 = vsub.s32 5, %v497
  %v499 = vrot.slane %v474, %v498
  %v506 = vmul.f32 %v328, %v479
  %v507 = vmul.f32 %v330, %v483
  %v508 = vmul.f32 %v399, %v487
  %v509 = vmul.f32 %v401, %v491
  %v510 = vmul.f32 %v470, %v495
  %v511 = vmul.f32 %v472, %v499
  %v512 = vadd.f32 %v506, %v507
  %v513 = vadd.f32 %v512, %v508
  %v514 = vadd.f32 %v513, %v509
  %v515 = vadd.f32 %v514, %v510
  %v516 = vadd.f32 %v515, %v511
  %517 = vadd.xlane.f32.xlu0 %v516
  %v518 = vpop.xlane.xlu0 %517
  %v519 = vmul.f32 %v506, %v328
  %v520 = vmul.f32 %v507, %v330
  %v521 = vmul.f32 %v508, %v399
  %v522 = vmul.f32 %v509, %v401
  %v523 = vmul.f32 %v510, %v470
  %v524 = vmul.f32 %v511, %v472
  %v525 = vadd.f32 %v519, %v520
  %v526 = vadd.f32 %v525, %v521
  %v527 = vadd.f32 %v526, %v522
  %v528 = vadd.f32 %v527, %v523
  %v529 = vadd.f32 %v528, %v524
  %530 = vadd.xlane.f32.xlu0 %v529
  %v531 = vpop.xlane.xlu0 %530
  %v532 = vmul.f32 %v518, 0.001953125
  %v533 = vmul.f32 %v531, 0.001953125
  %v534 = vmul.f32 %v532, %v532
  %v535 = vsub.f32 %v533, %v534
  %v536 = vld [vmem:[%s5] sm:$0xff]
  %v537 = vadd.f32 %v535, 1e-05
  %v538 = vrsqrt.pop %v537
  %v539 = vmul.f32 %v536, %v538
  %v540 = vmul.f32 %v532, %v539
  %542 = vrot.lane.b32.xlu0 %v540, 1
  %v543 = vpop.permute.xlu0 %542
  %v545 = vsub.f32 %v536, %v543
  %547 = vset.pattern.permute.xlu0 0
  %548 = vperm.xlu0 %547, %v539
  %v549 = vpop.permute.xlu0 %548
  %v551 = vmul.f32 %v328, %v549
  %v552 = vmul.f32 %v330, %v549
  %v553 = vmul.f32 %v399, %v549
  %v554 = vmul.f32 %v401, %v549
  %v555 = vmul.f32 %v470, %v549
  %v556 = vmul.f32 %v472, %v549
  %558 = vset.pattern.permute.xlu0 1
  %559 = vperm.xlu0 %558, %v545
  %v560 = vpop.permute.xlu0 %559
  %v562 = vadd.f32 %v551, %v560
  %v563 = vadd.f32 %v552, %v560
  %v564 = vadd.f32 %v553, %v560
  %v565 = vadd.f32 %v554, %v560
  %v566 = vadd.f32 %v555, %v560
  %v567 = vadd.f32 %v556, %v560
  %v568 = vmax.f32 %v562, 0.0
  %v569 = vmax.f32 %v563, 0.0
  %v570 = vmax.f32 %v564, 0.0
  %v571 = vmax.f32 %v565, 0.0
  %v572 = vmax.f32 %v566, 0.0
  %v573 = vmax.f32 %v567, 0.0
  %v574 = vld [vmem:[%s6] ss:$8 sm:$0x7]
  %580 = vrot.lane.b32.xlu0 %v568, 127
  %v581 = vpop.permute.xlu0 %580
  %582 = vrot.lane.b32.xlu0 %v569, 127
  %v583 = vpop.permute.xlu0 %582
  %584 = vrot.lane.b32.xlu0 %v570, 127
  %v585 = vpop.permute.xlu0 %584
  %586 = vrot.lane.b32.xlu0 %v571, 127
  %v587 = vpop.permute.xlu0 %586
  %588 = vrot.lane.b32.xlu0 %v572, 127
  %v589 = vpop.permute.xlu0 %588
  %v590 = vsel %vm55, %v581, %v583
  %v591 = vsel %vm55, %v583, %v585
  %v592 = vsel %vm55, %v585, %v587
  %v593 = vsel %vm55, %v587, %v589
  %v599 = vmax.f32 %v568, %v590
  %v600 = vmax.f32 %v569, %v591
  %v601 = vmax.f32 %v570, %v592
  %v602 = vmax.f32 %v571, %v593
  %v603 = vmax.f32 %v572, %v589
  %605 = vrot.lane.b32.xlu0 %v573, 127
  %v606 = vpop.permute.xlu0 %605
  %v607 = vsel %vm55, %v589, %v606
  %v610 = vmax.f32 %v572, %v607
  %v611 = vmax.f32 %v573, %v606
  %618 = vrot.lane.b32.xlu0 %v599, 110
  %v619 = vpop.permute.xlu0 %618
  %620 = vrot.lane.b32.xlu0 %v600, 110
  %v621 = vpop.permute.xlu0 %620
  %622 = vrot.lane.b32.xlu0 %v601, 110
  %v623 = vpop.permute.xlu0 %622
  %624 = vrot.lane.b32.xlu0 %v602, 110
  %v625 = vpop.permute.xlu0 %624
  %626 = vrot.lane.b32.xlu0 %v610, 110
  %v627 = vpop.permute.xlu0 %626
  %628 = vrot.lane.b32.xlu0 %v611, 110
  %v629 = vpop.permute.xlu0 %628
  %v630 = vsel %vm109, %v619, %v621
  %v631 = vsel %vm109, %v621, %v623
  %v632 = vsel %vm109, %v623, %v625
  %v633 = vsel %vm109, %v625, %v627
  %v634 = vsel %vm109, %v627, %v629
  %v640 = vmax.f32 %v599, %v630
  %v641 = vmax.f32 %v600, %v631
  %v642 = vmax.f32 %v601, %v632
  %v643 = vmax.f32 %v602, %v633
  %v644 = vmax.f32 %v603, %v634
  %v645 = vlaneseq
  %v646 = vshrl.u32 %v645, 7
  %v647 = vadd.s32 %v646, 8
  %v648 = vadd.s32 %v646, 16
  %v649 = vadd.s32 %v646, 24
  %v650 = vadd.s32 %v646, 32
  %v651 = vadd.s32 %v646, 40
  %v652 = vadd.s32 %v646, 48
  %v653 = vadd.s32 %v646, 56
  %v654 = vadd.s32 %v646, 64
  %v655 = vadd.s32 %v646, 72
  %v656 = vadd.s32 %v646, 80
  %v657 = vadd.s32 %v646, 88
  %v658 = vadd.s32 %v646, 96
  %v659 = vadd.s32 %v646, 104
  %v660 = vadd.s32 %v646, 112
  %v661 = vadd.s32 %v646, 120
  %v662 = vadd.s32 %v646, 128
  %v663 = vadd.s32 %v646, 136
  %v664 = vadd.s32 %v646, 144
  %v665 = vadd.s32 %v646, 152
  %v666 = vadd.s32 %v646, 160
  %v667 = vadd.s32 %v646, 168
  %v668 = vadd.s32 %v646, 176
  %v669 = vadd.s32 %v646, 184
  %v670 = vadd.s32 %v646, 192
  %v671 = vadd.s32 %v646, 200
  %v672 = vadd.s32 %v646, 208
  %v673 = vadd.s32 %v646, 216
  %v674 = vadd.s32 %v646, 224
  %v675 = vadd.s32 %v646, 232
  %v676 = vadd.s32 %v646, 240
  %v677 = vadd.s32 %v646, 248
  %v678 = vadd.s32 %v646, 256
  %v679 = vadd.s32 %v646, 264
  %v680 = vadd.s32 %v646, 272
  %v681 = vadd.s32 %v646, 280
  %v682 = vadd.s32 %v646, 288
  %v683 = vadd.s32 %v646, 296
  %v684 = vadd.s32 %v646, 304
  %v685 = vadd.s32 %v646, 312
  %v686 = vadd.s32 %v646, 320
  %v687 = vadd.s32 %v646, 328
  %v688 = vadd.s32 %v646, 336
  %v689 = vadd.s32 %v646, 344
  %v690 = vadd.s32 %v646, 352
  %v691 = vadd.s32 %v646, 360
  %v692 = vadd.s32 %v646, 368
  %v693 = vadd.s32 %v646, 376
  %v694 = vadd.s32 %v646, 384
  %v695 = vadd.s32 %v646, 392
  %v696 = vadd.s32 %v646, 400
  %v697 = vadd.s32 %v646, 408
  %v698 = vadd.s32 %v646, 416
  %v699 = vadd.s32 %v646, 424
  %v700 = vadd.s32 %v646, 432
  %v701 = vadd.s32 %v646, 440
  %v702 = vadd.s32 %v646, 448
  %v703 = vadd.s32 %v646, 456
  %v704 = vadd.s32 %v646, 464
  %v705 = vadd.s32 %v646, 472
  %v706 = vadd.s32 %v646, 480
  %v707 = vadd.s32 %v646, 488
  %v708 = vadd.s32 %v646, 496
  %v709 = vadd.s32 %v646, 504
  %v710 = vadd.s32 %v646, 512
  %v711 = vadd.s32 %v646, 520
  %v712 = vadd.s32 %v646, 528
  %v713 = vadd.s32 %v646, 536
  %v714 = vadd.s32 %v646, 544
  %v715 = vadd.s32 %v646, 552
  %v716 = vadd.s32 %v646, 560
  %v717 = vadd.s32 %v646, 568
  %v718 = vadd.s32 %v646, 576
  %v719 = vadd.s32 %v646, 584
  %v720 = vadd.s32 %v646, 592
  %v721 = vadd.s32 %v646, 600
  %v722 = vadd.s32 %v646, 608
  %v723 = vadd.s32 %v646, 616
  %v724 = vadd.s32 %v646, 624
  %v725 = vlaneseq
  %v726 = vshrl.u32 %v725, 7
  %v727 = vsub.s32 0, %v726
  %v728 = vrot.slane %v574, %v727
  %v729 = vlaneseq
  %v730 = vshrl.u32 %v729, 7
  %v731 = vsub.s32 1, %v730
  %v732 = vrot.slane %v574, %v731
  %v733 = vlaneseq
  %v734 = vshrl.u32 %v733, 7
  %v735 = vsub.s32 2, %v734
  %v736 = vrot.slane %v574, %v735
  %vm737 = vcmp.eq.s32.totalorder %v646, %v728
  %vm738 = vcmp.eq.s32.totalorder %v646, %v732
  %vm739 = vcmp.eq.s32.totalorder %v646, %v736
  %vm740 = vcmp.eq.s32.totalorder %v647, %v728
  %vm741 = vcmp.eq.s32.totalorder %v647, %v732
  %vm742 = vcmp.eq.s32.totalorder %v647, %v736
  %vm743 = vcmp.eq.s32.totalorder %v648, %v728
  %vm744 = vcmp.eq.s32.totalorder %v648, %v732
  %vm745 = vcmp.eq.s32.totalorder %v648, %v736
  %vm746 = vcmp.eq.s32.totalorder %v649, %v728
  %vm747 = vcmp.eq.s32.totalorder %v649, %v732
  %vm748 = vcmp.eq.s32.totalorder %v649, %v736
  %vm749 = vcmp.eq.s32.totalorder %v650, %v728
  %vm750 = vcmp.eq.s32.totalorder %v650, %v732
  %vm751 = vcmp.eq.s32.totalorder %v650, %v736
  %vm752 = vcmp.eq.s32.totalorder %v651, %v728
  %vm753 = vcmp.eq.s32.totalorder %v651, %v732
  %vm754 = vcmp.eq.s32.totalorder %v651, %v736
  %vm755 = vcmp.eq.s32.totalorder %v652, %v728
  %vm756 = vcmp.eq.s32.totalorder %v652, %v732
  %vm757 = vcmp.eq.s32.totalorder %v652, %v736
  %vm758 = vcmp.eq.s32.totalorder %v653, %v728
  %vm759 = vcmp.eq.s32.totalorder %v653, %v732
  %vm760 = vcmp.eq.s32.totalorder %v653, %v736
  %vm761 = vcmp.eq.s32.totalorder %v654, %v728
  %vm762 = vcmp.eq.s32.totalorder %v654, %v732
  %vm763 = vcmp.eq.s32.totalorder %v654, %v736
  %vm764 = vcmp.eq.s32.totalorder %v655, %v728
  %vm765 = vcmp.eq.s32.totalorder %v655, %v732
  %vm766 = vcmp.eq.s32.totalorder %v655, %v736
  %vm767 = vcmp.eq.s32.totalorder %v656, %v728
  %vm768 = vcmp.eq.s32.totalorder %v656, %v732
  %vm769 = vcmp.eq.s32.totalorder %v656, %v736
  %vm770 = vcmp.eq.s32.totalorder %v657, %v728
  %vm771 = vcmp.eq.s32.totalorder %v657, %v732
  %vm772 = vcmp.eq.s32.totalorder %v657, %v736
  %vm773 = vcmp.eq.s32.totalorder %v658, %v728
  %vm774 = vcmp.eq.s32.totalorder %v658, %v732
  %vm775 = vcmp.eq.s32.totalorder %v658, %v736
  %vm776 = vcmp.eq.s32.totalorder %v659, %v728
  %vm777 = vcmp.eq.s32.totalorder %v659, %v732
  %vm778 = vcmp.eq.s32.totalorder %v659, %v736
  %vm779 = vcmp.eq.s32.totalorder %v660, %v728
  %vm780 = vcmp.eq.s32.totalorder %v660, %v732
  %vm781 = vcmp.eq.s32.totalorder %v660, %v736
  %vm782 = vcmp.eq.s32.totalorder %v661, %v728
  %vm783 = vcmp.eq.s32.totalorder %v661, %v732
  %vm784 = vcmp.eq.s32.totalorder %v661, %v736
  %vm785 = vcmp.eq.s32.totalorder %v662, %v728
  %vm786 = vcmp.eq.s32.totalorder %v662, %v732
  %vm787 = vcmp.eq.s32.totalorder %v662, %v736
  %vm788 = vcmp.eq.s32.totalorder %v663, %v728
  %vm789 = vcmp.eq.s32.totalorder %v663, %v732
  %vm790 = vcmp.eq.s32.totalorder %v663, %v736
  %vm791 = vcmp.eq.s32.totalorder %v664, %v728
  %vm792 = vcmp.eq.s32.totalorder %v664, %v732
  %vm793 = vcmp.eq.s32.totalorder %v664, %v736
  %vm794 = vcmp.eq.s32.totalorder %v665, %v728
  %vm795 = vcmp.eq.s32.totalorder %v665, %v732
  %vm796 = vcmp.eq.s32.totalorder %v665, %v736
  %vm797 = vcmp.eq.s32.totalorder %v666, %v728
  %vm798 = vcmp.eq.s32.totalorder %v666, %v732
  %vm799 = vcmp.eq.s32.totalorder %v666, %v736
  %vm800 = vcmp.eq.s32.totalorder %v667, %v728
  %vm801 = vcmp.eq.s32.totalorder %v667, %v732
  %vm802 = vcmp.eq.s32.totalorder %v667, %v736
  %vm803 = vcmp.eq.s32.totalorder %v668, %v728
  %vm804 = vcmp.eq.s32.totalorder %v668, %v732
  %vm805 = vcmp.eq.s32.totalorder %v668, %v736
  %vm806 = vcmp.eq.s32.totalorder %v669, %v728
  %vm807 = vcmp.eq.s32.totalorder %v669, %v732
  %vm808 = vcmp.eq.s32.totalorder %v669, %v736
  %vm809 = vcmp.eq.s32.totalorder %v670, %v728
  %vm810 = vcmp.eq.s32.totalorder %v670, %v732
  %vm811 = vcmp.eq.s32.totalorder %v670, %v736
  %vm812 = vcmp.eq.s32.totalorder %v671, %v728
  %vm813 = vcmp.eq.s32.totalorder %v671, %v732
  %vm814 = vcmp.eq.s32.totalorder %v671, %v736
  %vm815 = vcmp.eq.s32.totalorder %v672, %v728
  %vm816 = vcmp.eq.s32.totalorder %v672, %v732
  %vm817 = vcmp.eq.s32.totalorder %v672, %v736
  %vm818 = vcmp.eq.s32.totalorder %v673, %v728
  %vm819 = vcmp.eq.s32.totalorder %v673, %v732
  %vm820 = vcmp.eq.s32.totalorder %v673, %v736
  %vm821 = vcmp.eq.s32.totalorder %v674, %v728
  %vm822 = vcmp.eq.s32.totalorder %v674, %v732
  %vm823 = vcmp.eq.s32.totalorder %v674, %v736
  %vm824 = vcmp.eq.s32.totalorder %v675, %v728
  %vm825 = vcmp.eq.s32.totalorder %v675, %v732
  %vm826 = vcmp.eq.s32.totalorder %v675, %v736
  %vm827 = vcmp.eq.s32.totalorder %v676, %v728
  %vm828 = vcmp.eq.s32.totalorder %v676, %v732
  %vm829 = vcmp.eq.s32.totalorder %v676, %v736
  %vm830 = vcmp.eq.s32.totalorder %v677, %v728
  %vm831 = vcmp.eq.s32.totalorder %v677, %v732
  %vm832 = vcmp.eq.s32.totalorder %v677, %v736
  %vm833 = vcmp.eq.s32.totalorder %v678, %v728
  %vm834 = vcmp.eq.s32.totalorder %v678, %v732
  %vm835 = vcmp.eq.s32.totalorder %v678, %v736
  %vm836 = vcmp.eq.s32.totalorder %v679, %v728
  %vm837 = vcmp.eq.s32.totalorder %v679, %v732
  %vm838 = vcmp.eq.s32.totalorder %v679, %v736
  %vm839 = vcmp.eq.s32.totalorder %v680, %v728
  %vm840 = vcmp.eq.s32.totalorder %v680, %v732
  %vm841 = vcmp.eq.s32.totalorder %v680, %v736
  %vm842 = vcmp.eq.s32.totalorder %v681, %v728
  %vm843 = vcmp.eq.s32.totalorder %v681, %v732
  %vm844 = vcmp.eq.s32.totalorder %v681, %v736
  %vm845 = vcmp.eq.s32.totalorder %v682, %v728
  %vm846 = vcmp.eq.s32.totalorder %v682, %v732
  %vm847 = vcmp.eq.s32.totalorder %v682, %v736
  %vm848 = vcmp.eq.s32.totalorder %v683, %v728
  %vm849 = vcmp.eq.s32.totalorder %v683, %v732
  %vm850 = vcmp.eq.s32.totalorder %v683, %v736
  %vm851 = vcmp.eq.s32.totalorder %v684, %v728
  %vm852 = vcmp.eq.s32.totalorder %v684, %v732
  %vm853 = vcmp.eq.s32.totalorder %v684, %v736
  %vm854 = vcmp.eq.s32.totalorder %v685, %v728
  %vm855 = vcmp.eq.s32.totalorder %v685, %v732
  %vm856 = vcmp.eq.s32.totalorder %v685, %v736
  %vm857 = vcmp.eq.s32.totalorder %v686, %v728
  %vm858 = vcmp.eq.s32.totalorder %v686, %v732
  %vm859 = vcmp.eq.s32.totalorder %v686, %v736
  %vm860 = vcmp.eq.s32.totalorder %v687, %v728
  %vm861 = vcmp.eq.s32.totalorder %v687, %v732
  %vm862 = vcmp.eq.s32.totalorder %v687, %v736
  %vm863 = vcmp.eq.s32.totalorder %v688, %v728
  %vm864 = vcmp.eq.s32.totalorder %v688, %v732
  %vm865 = vcmp.eq.s32.totalorder %v688, %v736
  %vm866 = vcmp.eq.s32.totalorder %v689, %v728
  %vm867 = vcmp.eq.s32.totalorder %v689, %v732
  %vm868 = vcmp.eq.s32.totalorder %v689, %v736
  %vm869 = vcmp.eq.s32.totalorder %v690, %v728
  %vm870 = vcmp.eq.s32.totalorder %v690, %v732
  %vm871 = vcmp.eq.s32.totalorder %v690, %v736
  %vm872 = vcmp.eq.s32.totalorder %v691, %v728
  %vm873 = vcmp.eq.s32.totalorder %v691, %v732
  %vm874 = vcmp.eq.s32.totalorder %v691, %v736
  %vm875 = vcmp.eq.s32.totalorder %v692, %v728
  %vm876 = vcmp.eq.s32.totalorder %v692, %v732
  %vm877 = vcmp.eq.s32.totalorder %v692, %v736
  %vm878 = vcmp.eq.s32.totalorder %v693, %v728
  %vm879 = vcmp.eq.s32.totalorder %v693, %v732
  %vm880 = vcmp.eq.s32.totalorder %v693, %v736
  %vm881 = vcmp.eq.s32.totalorder %v694, %v728
  %vm882 = vcmp.eq.s32.totalorder %v694, %v732
  %vm883 = vcmp.eq.s32.totalorder %v694, %v736
  %vm884 = vcmp.eq.s32.totalorder %v695, %v728
  %vm885 = vcmp.eq.s32.totalorder %v695, %v732
  %vm886 = vcmp.eq.s32.totalorder %v695, %v736
  %vm887 = vcmp.eq.s32.totalorder %v696, %v728
  %vm888 = vcmp.eq.s32.totalorder %v696, %v732
  %vm889 = vcmp.eq.s32.totalorder %v696, %v736
  %vm890 = vcmp.eq.s32.totalorder %v697, %v728
  %vm891 = vcmp.eq.s32.totalorder %v697, %v732
  %vm892 = vcmp.eq.s32.totalorder %v697, %v736
  %vm893 = vcmp.eq.s32.totalorder %v698, %v728
  %vm894 = vcmp.eq.s32.totalorder %v698, %v732
  %vm895 = vcmp.eq.s32.totalorder %v698, %v736
  %vm896 = vcmp.eq.s32.totalorder %v699, %v728
  %vm897 = vcmp.eq.s32.totalorder %v699, %v732
  %vm898 = vcmp.eq.s32.totalorder %v699, %v736
  %vm899 = vcmp.eq.s32.totalorder %v700, %v728
  %vm900 = vcmp.eq.s32.totalorder %v700, %v732
  %vm901 = vcmp.eq.s32.totalorder %v700, %v736
  %vm902 = vcmp.eq.s32.totalorder %v701, %v728
  %vm903 = vcmp.eq.s32.totalorder %v701, %v732
  %vm904 = vcmp.eq.s32.totalorder %v701, %v736
  %vm905 = vcmp.eq.s32.totalorder %v702, %v728
  %vm906 = vcmp.eq.s32.totalorder %v702, %v732
  %vm907 = vcmp.eq.s32.totalorder %v702, %v736
  %vm908 = vcmp.eq.s32.totalorder %v703, %v728
  %vm909 = vcmp.eq.s32.totalorder %v703, %v732
  %vm910 = vcmp.eq.s32.totalorder %v703, %v736
  %vm911 = vcmp.eq.s32.totalorder %v704, %v728
  %vm912 = vcmp.eq.s32.totalorder %v704, %v732
  %vm913 = vcmp.eq.s32.totalorder %v704, %v736
  %vm914 = vcmp.eq.s32.totalorder %v705, %v728
  %vm915 = vcmp.eq.s32.totalorder %v705, %v732
  %vm916 = vcmp.eq.s32.totalorder %v705, %v736
  %vm917 = vcmp.eq.s32.totalorder %v706, %v728
  %vm918 = vcmp.eq.s32.totalorder %v706, %v732
  %vm919 = vcmp.eq.s32.totalorder %v706, %v736
  %vm920 = vcmp.eq.s32.totalorder %v707, %v728
  %vm921 = vcmp.eq.s32.totalorder %v707, %v732
  %vm922 = vcmp.eq.s32.totalorder %v707, %v736
  %vm923 = vcmp.eq.s32.totalorder %v708, %v728
  %vm924 = vcmp.eq.s32.totalorder %v708, %v732
  %vm925 = vcmp.eq.s32.totalorder %v708, %v736
  %vm926 = vcmp.eq.s32.totalorder %v709, %v728
  %vm927 = vcmp.eq.s32.totalorder %v709, %v732
  %vm928 = vcmp.eq.s32.totalorder %v709, %v736
  %vm929 = vcmp.eq.s32.totalorder %v710, %v728
  %vm930 = vcmp.eq.s32.totalorder %v710, %v732
  %vm931 = vcmp.eq.s32.totalorder %v710, %v736
  %vm932 = vcmp.eq.s32.totalorder %v711, %v728
  %vm933 = vcmp.eq.s32.totalorder %v711, %v732
  %vm934 = vcmp.eq.s32.totalorder %v711, %v736
  %vm935 = vcmp.eq.s32.totalorder %v712, %v728
  %vm936 = vcmp.eq.s32.totalorder %v712, %v732
  %vm937 = vcmp.eq.s32.totalorder %v712, %v736
  %vm938 = vcmp.eq.s32.totalorder %v713, %v728
  %vm939 = vcmp.eq.s32.totalorder %v713, %v732
  %vm940 = vcmp.eq.s32.totalorder %v713, %v736
  %vm941 = vcmp.eq.s32.totalorder %v714, %v728
  %vm942 = vcmp.eq.s32.totalorder %v714, %v732
  %vm943 = vcmp.eq.s32.totalorder %v714, %v736
  %vm944 = vcmp.eq.s32.totalorder %v715, %v728
  %vm945 = vcmp.eq.s32.totalorder %v715, %v732
  %vm946 = vcmp.eq.s32.totalorder %v715, %v736
  %vm947 = vcmp.eq.s32.totalorder %v716, %v728
  %vm948 = vcmp.eq.s32.totalorder %v716, %v732
  %vm949 = vcmp.eq.s32.totalorder %v716, %v736
  %vm950 = vcmp.eq.s32.totalorder %v717, %v728
  %vm951 = vcmp.eq.s32.totalorder %v717, %v732
  %vm952 = vcmp.eq.s32.totalorder %v717, %v736
  %vm953 = vcmp.eq.s32.totalorder %v718, %v728
  %vm954 = vcmp.eq.s32.totalorder %v718, %v732
  %vm955 = vcmp.eq.s32.totalorder %v718, %v736
  %vm956 = vcmp.eq.s32.totalorder %v719, %v728
  %vm957 = vcmp.eq.s32.totalorder %v719, %v732
  %vm958 = vcmp.eq.s32.totalorder %v719, %v736
  %vm959 = vcmp.eq.s32.totalorder %v720, %v728
  %vm960 = vcmp.eq.s32.totalorder %v720, %v732
  %vm961 = vcmp.eq.s32.totalorder %v720, %v736
  %vm962 = vcmp.eq.s32.totalorder %v721, %v728
  %vm963 = vcmp.eq.s32.totalorder %v721, %v732
  %vm964 = vcmp.eq.s32.totalorder %v721, %v736
  %vm965 = vcmp.eq.s32.totalorder %v722, %v728
  %vm966 = vcmp.eq.s32.totalorder %v722, %v732
  %vm967 = vcmp.eq.s32.totalorder %v722, %v736
  %vm968 = vcmp.eq.s32.totalorder %v723, %v728
  %vm969 = vcmp.eq.s32.totalorder %v723, %v732
  %vm970 = vcmp.eq.s32.totalorder %v723, %v736
  %vm971 = vcmp.eq.s32.totalorder %v724, %v728
  %vm972 = vcmp.eq.s32.totalorder %v724, %v732
  %vm973 = vcmp.eq.s32.totalorder %v724, %v736
  %v974 = vsel %vm737, 1.0, 0.0
  %v975 = vsel %vm738, 1.0, 0.0
  %v976 = vsel %vm739, 1.0, 0.0
  %v977 = vsel %vm740, 1.0, 0.0
  %v978 = vsel %vm741, 1.0, 0.0
  %v979 = vsel %vm742, 1.0, 0.0
  %v980 = vsel %vm743, 1.0, 0.0
  %v981 = vsel %vm744, 1.0, 0.0
  %v982 = vsel %vm745, 1.0, 0.0
  %v983 = vsel %vm746, 1.0, 0.0
  %v984 = vsel %vm747, 1.0, 0.0
  %v985 = vsel %vm748, 1.0, 0.0
  %v986 = vsel %vm749, 1.0, 0.0
  %v987 = vsel %vm750, 1.0, 0.0
  %v988 = vsel %vm751, 1.0, 0.0
  %v989 = vsel %vm752, 1.0, 0.0
  %v990 = vsel %vm753, 1.0, 0.0
  %v991 = vsel %vm754, 1.0, 0.0
  %v992 = vsel %vm755, 1.0, 0.0
  %v993 = vsel %vm756, 1.0, 0.0
  %v994 = vsel %vm757, 1.0, 0.0
  %v995 = vsel %vm758, 1.0, 0.0
  %v996 = vsel %vm759, 1.0, 0.0
  %v997 = vsel %vm760, 1.0, 0.0
  %v998 = vsel %vm761, 1.0, 0.0
  %v999 = vsel %vm762, 1.0, 0.0
  %v1000 = vsel %vm763, 1.0, 0.0
  %v1001 = vsel %vm764, 1.0, 0.0
  %v1002 = vsel %vm765, 1.0, 0.0
  %v1003 = vsel %vm766, 1.0, 0.0
  %v1004 = vsel %vm767, 1.0, 0.0
  %v1005 = vsel %vm768, 1.0, 0.0
  %v1006 = vsel %vm769, 1.0, 0.0
  %v1007 = vsel %vm770, 1.0, 0.0
  %v1008 = vsel %vm771, 1.0, 0.0
  %v1009 = vsel %vm772, 1.0, 0.0
  %v1010 = vsel %vm773, 1.0, 0.0
  %v1011 = vsel %vm774, 1.0, 0.0
  %v1012 = vsel %vm775, 1.0, 0.0
  %v1013 = vsel %vm776, 1.0, 0.0
  %v1014 = vsel %vm777, 1.0, 0.0
  %v1015 = vsel %vm778, 1.0, 0.0
  %v1016 = vsel %vm779, 1.0, 0.0
  %v1017 = vsel %vm780, 1.0, 0.0
  %v1018 = vsel %vm781, 1.0, 0.0
  %v1019 = vsel %vm782, 1.0, 0.0
  %v1020 = vsel %vm783, 1.0, 0.0
  %v1021 = vsel %vm784, 1.0, 0.0
  %v1022 = vsel %vm785, 1.0, 0.0
  %v1023 = vsel %vm786, 1.0, 0.0
  %v1024 = vsel %vm787, 1.0, 0.0
  %v1025 = vsel %vm788, 1.0, 0.0
  %v1026 = vsel %vm789, 1.0, 0.0
  %v1027 = vsel %vm790, 1.0, 0.0
  %v1028 = vsel %vm791, 1.0, 0.0
  %v1029 = vsel %vm792, 1.0, 0.0
  %v1030 = vsel %vm793, 1.0, 0.0
  %v1031 = vsel %vm794, 1.0, 0.0
  %v1032 = vsel %vm795, 1.0, 0.0
  %v1033 = vsel %vm796, 1.0, 0.0
  %v1034 = vsel %vm797, 1.0, 0.0
  %v1035 = vsel %vm798, 1.0, 0.0
  %v1036 = vsel %vm799, 1.0, 0.0
  %v1037 = vsel %vm800, 1.0, 0.0
  %v1038 = vsel %vm801, 1.0, 0.0
  %v1039 = vsel %vm802, 1.0, 0.0
  %v1040 = vsel %vm803, 1.0, 0.0
  %v1041 = vsel %vm804, 1.0, 0.0
  %v1042 = vsel %vm805, 1.0, 0.0
  %v1043 = vsel %vm806, 1.0, 0.0
  %v1044 = vsel %vm807, 1.0, 0.0
  %v1045 = vsel %vm808, 1.0, 0.0
  %v1046 = vsel %vm809, 1.0, 0.0
  %v1047 = vsel %vm810, 1.0, 0.0
  %v1048 = vsel %vm811, 1.0, 0.0
  %v1049 = vsel %vm812, 1.0, 0.0
  %v1050 = vsel %vm813, 1.0, 0.0
  %v1051 = vsel %vm814, 1.0, 0.0
  %v1052 = vsel %vm815, 1.0, 0.0
  %v1053 = vsel %vm816, 1.0, 0.0
  %v1054 = vsel %vm817, 1.0, 0.0
  %v1055 = vsel %vm818, 1.0, 0.0
  %v1056 = vsel %vm819, 1.0, 0.0
  %v1057 = vsel %vm820, 1.0, 0.0
  %v1058 = vsel %vm821, 1.0, 0.0
  %v1059 = vsel %vm822, 1.0, 0.0
  %v1060 = vsel %vm823, 1.0, 0.0
  %v1061 = vsel %vm824, 1.0, 0.0
  %v1062 = vsel %vm825, 1.0, 0.0
  %v1063 = vsel %vm826, 1.0, 0.0
  %v1064 = vsel %vm827, 1.0, 0.0
  %v1065 = vsel %vm828, 1.0, 0.0
  %v1066 = vsel %vm829, 1.0, 0.0
  %v1067 = vsel %vm830, 1.0, 0.0
  %v1068 = vsel %vm831, 1.0, 0.0
  %v1069 = vsel %vm832, 1.0, 0.0
  %v1070 = vsel %vm833, 1.0, 0.0
  %v1071 = vsel %vm834, 1.0, 0.0
  %v1072 = vsel %vm835, 1.0, 0.0
  %v1073 = vsel %vm836, 1.0, 0.0
  %v1074 = vsel %vm837, 1.0, 0.0
  %v1075 = vsel %vm838, 1.0, 0.0
  %v1076 = vsel %vm839, 1.0, 0.0
  %v1077 = vsel %vm840, 1.0, 0.0
  %v1078 = vsel %vm841, 1.0, 0.0
  %v1079 = vsel %vm842, 1.0, 0.0
  %v1080 = vsel %vm843, 1.0, 0.0
  %v1081 = vsel %vm844, 1.0, 0.0
  %v1082 = vsel %vm845, 1.0, 0.0
  %v1083 = vsel %vm846, 1.0, 0.0
  %v1084 = vsel %vm847, 1.0, 0.0
  %v1085 = vsel %vm848, 1.0, 0.0
  %v1086 = vsel %vm849, 1.0, 0.0
  %v1087 = vsel %vm850, 1.0, 0.0
  %v1088 = vsel %vm851, 1.0, 0.0
  %v1089 = vsel %vm852, 1.0, 0.0
  %v1090 = vsel %vm853, 1.0, 0.0
  %v1091 = vsel %vm854, 1.0, 0.0
  %v1092 = vsel %vm855, 1.0, 0.0
  %v1093 = vsel %vm856, 1.0, 0.0
  %v1094 = vsel %vm857, 1.0, 0.0
  %v1095 = vsel %vm858, 1.0, 0.0
  %v1096 = vsel %vm859, 1.0, 0.0
  %v1097 = vsel %vm860, 1.0, 0.0
  %v1098 = vsel %vm861, 1.0, 0.0
  %v1099 = vsel %vm862, 1.0, 0.0
  %v1100 = vsel %vm863, 1.0, 0.0
  %v1101 = vsel %vm864, 1.0, 0.0
  %v1102 = vsel %vm865, 1.0, 0.0
  %v1103 = vsel %vm866, 1.0, 0.0
  %v1104 = vsel %vm867, 1.0, 0.0
  %v1105 = vsel %vm868, 1.0, 0.0
  %v1106 = vsel %vm869, 1.0, 0.0
  %v1107 = vsel %vm870, 1.0, 0.0
  %v1108 = vsel %vm871, 1.0, 0.0
  %v1109 = vsel %vm872, 1.0, 0.0
  %v1110 = vsel %vm873, 1.0, 0.0
  %v1111 = vsel %vm874, 1.0, 0.0
  %v1112 = vsel %vm875, 1.0, 0.0
  %v1113 = vsel %vm876, 1.0, 0.0
  %v1114 = vsel %vm877, 1.0, 0.0
  %v1115 = vsel %vm878, 1.0, 0.0
  %v1116 = vsel %vm879, 1.0, 0.0
  %v1117 = vsel %vm880, 1.0, 0.0
  %v1118 = vsel %vm881, 1.0, 0.0
  %v1119 = vsel %vm882, 1.0, 0.0
  %v1120 = vsel %vm883, 1.0, 0.0
  %v1121 = vsel %vm884, 1.0, 0.0
  %v1122 = vsel %vm885, 1.0, 0.0
  %v1123 = vsel %vm886, 1.0, 0.0
  %v1124 = vsel %vm887, 1.0, 0.0
  %v1125 = vsel %vm888, 1.0, 0.0
  %v1126 = vsel %vm889, 1.0, 0.0
  %v1127 = vsel %vm890, 1.0, 0.0
  %v1128 = vsel %vm891, 1.0, 0.0
  %v1129 = vsel %vm892, 1.0, 0.0
  %v1130 = vsel %vm893, 1.0, 0.0
  %v1131 = vsel %vm894, 1.0, 0.0
  %v1132 = vsel %vm895, 1.0, 0.0
  %v1133 = vsel %vm896, 1.0, 0.0
  %v1134 = vsel %vm897, 1.0, 0.0
  %v1135 = vsel %vm898, 1.0, 0.0
  %v1136 = vsel %vm899, 1.0, 0.0
  %v1137 = vsel %vm900, 1.0, 0.0
  %v1138 = vsel %vm901, 1.0, 0.0
  %v1139 = vsel %vm902, 1.0, 0.0
  %v1140 = vsel %vm903, 1.0, 0.0
  %v1141 = vsel %vm904, 1.0, 0.0
  %v1142 = vsel %vm905, 1.0, 0.0
  %v1143 = vsel %vm906, 1.0, 0.0
  %v1144 = vsel %vm907, 1.0, 0.0
  %v1145 = vsel %vm908, 1.0, 0.0
  %v1146 = vsel %vm909, 1.0, 0.0
  %v1147 = vsel %vm910, 1.0, 0.0
  %v1148 = vsel %vm911, 1.0, 0.0
  %v1149 = vsel %vm912, 1.0, 0.0
  %v1150 = vsel %vm913, 1.0, 0.0
  %v1151 = vsel %vm914, 1.0, 0.0
  %v1152 = vsel %vm915, 1.0, 0.0
  %v1153 = vsel %vm916, 1.0, 0.0
  %v1154 = vsel %vm917, 1.0, 0.0
  %v1155 = vsel %vm918, 1.0, 0.0
  %v1156 = vsel %vm919, 1.0, 0.0
  %v1157 = vsel %vm920, 1.0, 0.0
  %v1158 = vsel %vm921, 1.0, 0.0
  %v1159 = vsel %vm922, 1.0, 0.0
  %v1160 = vsel %vm923, 1.0, 0.0
  %v1161 = vsel %vm924, 1.0, 0.0
  %v1162 = vsel %vm925, 1.0, 0.0
  %v1163 = vsel %vm926, 1.0, 0.0
  %v1164 = vsel %vm927, 1.0, 0.0
  %v1165 = vsel %vm928, 1.0, 0.0
  %v1166 = vsel %vm929, 1.0, 0.0
  %v1167 = vsel %vm930, 1.0, 0.0
  %v1168 = vsel %vm931, 1.0, 0.0
  %v1169 = vsel %vm932, 1.0, 0.0
  %v1170 = vsel %vm933, 1.0, 0.0
  %v1171 = vsel %vm934, 1.0, 0.0
  %v1172 = vsel %vm935, 1.0, 0.0
  %v1173 = vsel %vm936, 1.0, 0.0
  %v1174 = vsel %vm937, 1.0, 0.0
  %v1175 = vsel %vm938, 1.0, 0.0
  %v1176 = vsel %vm939, 1.0, 0.0
  %v1177 = vsel %vm940, 1.0, 0.0
  %v1178 = vsel %vm941, 1.0, 0.0
  %v1179 = vsel %vm942, 1.0, 0.0
  %v1180 = vsel %vm943, 1.0, 0.0
  %v1181 = vsel %vm944, 1.0, 0.0
  %v1182 = vsel %vm945, 1.0, 0.0
  %v1183 = vsel %vm946, 1.0, 0.0
  %v1184 = vsel %vm947, 1.0, 0.0
  %v1185 = vsel %vm948, 1.0, 0.0
  %v1186 = vsel %vm949, 1.0, 0.0
  %v1187 = vsel %vm950, 1.0, 0.0
  %v1188 = vsel %vm951, 1.0, 0.0
  %v1189 = vsel %vm952, 1.0, 0.0
  %v1190 = vsel %vm953, 1.0, 0.0
  %v1191 = vsel %vm954, 1.0, 0.0
  %v1192 = vsel %vm955, 1.0, 0.0
  %v1193 = vsel %vm956, 1.0, 0.0
  %v1194 = vsel %vm957, 1.0, 0.0
  %v1195 = vsel %vm958, 1.0, 0.0
  %v1196 = vsel %vm959, 1.0, 0.0
  %v1197 = vsel %vm960, 1.0, 0.0
  %v1198 = vsel %vm961, 1.0, 0.0
  %v1199 = vsel %vm962, 1.0, 0.0
  %v1200 = vsel %vm963, 1.0, 0.0
  %v1201 = vsel %vm964, 1.0, 0.0
  %v1202 = vsel %vm965, 1.0, 0.0
  %v1203 = vsel %vm966, 1.0, 0.0
  %v1204 = vsel %vm967, 1.0, 0.0
  %v1205 = vsel %vm968, 1.0, 0.0
  %v1206 = vsel %vm969, 1.0, 0.0
  %v1207 = vsel %vm970, 1.0, 0.0
  %v1208 = vsel %vm971, 1.0, 0.0
  %v1209 = vsel %vm972, 1.0, 0.0
  %v1210 = vsel %vm973, 1.0, 0.0
  %vm1211 = vcmask 982016
  %v1213 = vsel %vm1211, %v644, 0
  %1215 = vmatprep.subr.mxu0 %v1020
  %1216 = vmatpush1.msra.mxu0 %v1019
  %1217 = vmatprep.subr.mxu0 %v1017
  %1218 = vmatpush1.msra.mxu0 %v1016
  %1219 = vmatprep.subr.mxu0 %v1014
  %1220 = vmatpush1.msra.mxu0 %v1013
  %1221 = vmatprep.subr.mxu0 %v1011
  %1222 = vmatpush1.msra.mxu0 %v1010
  %1223 = vmatprep.subr.mxu0 %v1008
  %1224 = vmatpush1.msra.mxu0 %v1007
  %1225 = vmatprep.subr.mxu0 %v1005
  %1226 = vmatpush1.msra.mxu0 %v1004
  %1227 = vmatprep.subr.mxu0 %v1002
  %1228 = vmatpush1.msra.mxu0 %v1001
  %1229 = vmatprep.subr.mxu0 %v999
  %1230 = vmatpush1.msra.mxu0 %v998
  %1231 = vmatprep.subr.mxu0 %v996
  %1232 = vmatpush1.msra.mxu0 %v995
  %1233 = vmatprep.subr.mxu0 %v993
  %1234 = vmatpush1.msra.mxu0 %v992
  %1235 = vmatprep.subr.mxu0 %v990
  %1236 = vmatpush1.msra.mxu0 %v989
  %1237 = vmatprep.subr.mxu0 %v987
  %1238 = vmatpush1.msra.mxu0 %v986
  %1239 = vmatprep.subr.mxu0 %v984
  %1240 = vmatpush1.msra.mxu0 %v983
  %1241 = vmatprep.subr.mxu0 %v981
  %1242 = vmatpush1.msra.mxu0 %v980
  %1243 = vmatprep.subr.mxu0 %v978
  %1244 = vmatpush1.msra.mxu0 %v977
  %1245 = vmatprep.subr.mxu0 %v975
  %1246 = vmatpush1.msra.mxu0 %v974
  %1247 = vmatprep.subr.mxu0 %v1068
  %1248 = vmatpush2.msra.mxu0 %v1067
  %1249 = vmatprep.subr.mxu0 %v1065
  %1250 = vmatpush2.msra.mxu0 %v1064
  %1251 = vmatprep.subr.mxu0 %v1062
  %1252 = vmatpush2.msra.mxu0 %v1061
  %1253 = vmatprep.subr.mxu0 %v1059
  %1254 = vmatpush2.msra.mxu0 %v1058
  %1255 = vmatprep.subr.mxu0 %v1056
  %1256 = vmatpush2.msra.mxu0 %v1055
  %1257 = vmatprep.subr.mxu0 %v1053
  %1258 = vmatpush2.msra.mxu0 %v1052
  %1259 = vmatprep.subr.mxu0 %v1050
  %1260 = vmatpush2.msra.mxu0 %v1049
  %1261 = vmatprep.subr.mxu0 %v1047
  %1262 = vmatpush2.msra.mxu0 %v1046
  %1263 = vmatprep.subr.mxu0 %v1044
  %1264 = vmatpush2.msra.mxu0 %v1043
  %1265 = vmatprep.subr.mxu0 %v1041
  %1266 = vmatpush2.msra.mxu0 %v1040
  %1267 = vmatprep.subr.mxu0 %v1038
  %1268 = vmatpush2.msra.mxu0 %v1037
  %1269 = vmatprep.subr.mxu0 %v1035
  %1270 = vmatpush2.msra.mxu0 %v1034
  %1271 = vmatprep.subr.mxu0 %v1032
  %1272 = vmatpush2.msra.mxu0 %v1031
  %1273 = vmatprep.subr.mxu0 %v1029
  %1274 = vmatpush2.msra.mxu0 %v1028
  %1275 = vmatprep.subr.mxu0 %v1026
  %1276 = vmatpush2.msra.mxu0 %v1025
  %1277 = vmatprep.subr.mxu0 %v1023
  %1278 = vmatpush2.msra.mxu0 %v1022
  %1279 = vmatprep.mubr.f32.mxu0 %v641
  %1280 = vmatmul.mubr.f32.gmra.mxu0 %v640
  %v1281 = vpop.f32.mrf.mxu0
  %v1282 = vadd.f32 0.0, %v1281
  %v1283 = vpop.f32.mrf.mxu0
  %v1284 = vadd.f32 0.0, %v1283
  %1285 = vdwg.mxu0
  %1286 = vmatprep.subr.mxu0 %v1116
  %1287 = vmatpush1.msra.mxu0 %v1115
  %1288 = vmatprep.subr.mxu0 %v1113
  %1289 = vmatpush1.msra.mxu0 %v1112
  %1290 = vmatprep.subr.mxu0 %v1110
  %1291 = vmatpush1.msra.mxu0 %v1109
  %1292 = vmatprep.subr.mxu0 %v1107
  %1293 = vmatpush1.msra.mxu0 %v1106
  %1294 = vmatprep.subr.mxu0 %v1104
  %1295 = vmatpush1.msra.mxu0 %v1103
  %1296 = vmatprep.subr.mxu0 %v1101
  %1297 = vmatpush1.msra.mxu0 %v1100
  %1298 = vmatprep.subr.mxu0 %v1098
  %1299 = vmatpush1.msra.mxu0 %v1097
  %1300 = vmatprep.subr.mxu0 %v1095
  %1301 = vmatpush1.msra.mxu0 %v1094
  %1302 = vmatprep.subr.mxu0 %v1092
  %1303 = vmatpush1.msra.mxu0 %v1091
  %1304 = vmatprep.subr.mxu0 %v1089
  %1305 = vmatpush1.msra.mxu0 %v1088
  %1306 = vmatprep.subr.mxu0 %v1086
  %1307 = vmatpush1.msra.mxu0 %v1085
  %1308 = vmatprep.subr.mxu0 %v1083
  %1309 = vmatpush1.msra.mxu0 %v1082
  %1310 = vmatprep.subr.mxu0 %v1080
  %1311 = vmatpush1.msra.mxu0 %v1079
  %1312 = vmatprep.subr.mxu0 %v1077
  %1313 = vmatpush1.msra.mxu0 %v1076
  %1314 = vmatprep.subr.mxu0 %v1074
  %1315 = vmatpush1.msra.mxu0 %v1073
  %1316 = vmatprep.subr.mxu0 %v1071
  %1317 = vmatpush1.msra.mxu0 %v1070
  %1318 = vmatprep.subr.mxu0 %v1164
  %1319 = vmatpush2.msra.mxu0 %v1163
  %1320 = vmatprep.subr.mxu0 %v1161
  %1321 = vmatpush2.msra.mxu0 %v1160
  %1322 = vmatprep.subr.mxu0 %v1158
  %1323 = vmatpush2.msra.mxu0 %v1157
  %1324 = vmatprep.subr.mxu0 %v1155
  %1325 = vmatpush2.msra.mxu0 %v1154
  %1326 = vmatprep.subr.mxu0 %v1152
  %1327 = vmatpush2.msra.mxu0 %v1151
  %1328 = vmatprep.subr.mxu0 %v1149
  %1329 = vmatpush2.msra.mxu0 %v1148
  %1330 = vmatprep.subr.mxu0 %v1146
  %1331 = vmatpush2.msra.mxu0 %v1145
  %1332 = vmatprep.subr.mxu0 %v1143
  %1333 = vmatpush2.msra.mxu0 %v1142
  %1334 = vmatprep.subr.mxu0 %v1140
  %1335 = vmatpush2.msra.mxu0 %v1139
  %1336 = vmatprep.subr.mxu0 %v1137
  %1337 = vmatpush2.msra.mxu0 %v1136
  %1338 = vmatprep.subr.mxu0 %v1134
  %1339 = vmatpush2.msra.mxu0 %v1133
  %1340 = vmatprep.subr.mxu0 %v1131
  %1341 = vmatpush2.msra.mxu0 %v1130
  %1342 = vmatprep.subr.mxu0 %v1128
  %1343 = vmatpush2.msra.mxu0 %v1127
  %1344 = vmatprep.subr.mxu0 %v1125
  %1345 = vmatpush2.msra.mxu0 %v1124
  %1346 = vmatprep.subr.mxu0 %v1122
  %1347 = vmatpush2.msra.mxu0 %v1121
  %1348 = vmatprep.subr.mxu0 %v1119
  %1349 = vmatpush2.msra.mxu0 %v1118
  %1350 = vmatprep.mubr.f32.mxu0 %v643
  %1351 = vmatmul.mubr.f32.gmra.mxu0 %v642
  %v1352 = vpop.f32.mrf.mxu0
  %v1353 = vadd.f32 %v1282, %v1352
  %v1354 = vpop.f32.mrf.mxu0
  %v1355 = vadd.f32 %v1284, %v1354
  %1356 = vdwg.mxu0
  %1357 = vmatprep.subr.mxu0 0.0
  %1358 = vmatpush1.msra.mxu0 0.0
  %1359 = vmatprep.subr.mxu0 %v1209
  %1360 = vmatpush1.msra.mxu0 %v1208
  %1361 = vmatprep.subr.mxu0 %v1206
  %1362 = vmatpush1.msra.mxu0 %v1205
  %1363 = vmatprep.subr.mxu0 %v1203
  %1364 = vmatpush1.msra.mxu0 %v1202
  %1365 = vmatprep.subr.mxu0 %v1200
  %1366 = vmatpush1.msra.mxu0 %v1199
  %1367 = vmatprep.subr.mxu0 %v1197
  %1368 = vmatpush1.msra.mxu0 %v1196
  %1369 = vmatprep.subr.mxu0 %v1194
  %1370 = vmatpush1.msra.mxu0 %v1193
  %1371 = vmatprep.subr.mxu0 %v1191
  %1372 = vmatpush1.msra.mxu0 %v1190
  %1373 = vmatprep.subr.mxu0 %v1188
  %1374 = vmatpush1.msra.mxu0 %v1187
  %1375 = vmatprep.subr.mxu0 %v1185
  %1376 = vmatpush1.msra.mxu0 %v1184
  %1377 = vmatprep.subr.mxu0 %v1182
  %1378 = vmatpush1.msra.mxu0 %v1181
  %1379 = vmatprep.subr.mxu0 %v1179
  %1380 = vmatpush1.msra.mxu0 %v1178
  %1381 = vmatprep.subr.mxu0 %v1176
  %1382 = vmatpush1.msra.mxu0 %v1175
  %1383 = vmatprep.subr.mxu0 %v1173
  %1384 = vmatpush1.msra.mxu0 %v1172
  %1385 = vmatprep.subr.mxu0 %v1170
  %1386 = vmatpush1.msra.mxu0 %v1169
  %1387 = vmatprep.subr.mxu0 %v1167
  %1388 = vmatpush1.msra.mxu0 %v1166
  %1389 = vmatprep.subr.mxu0 0.0
  %1390 = vmatpush2.msra.mxu0 0.0
  %1391 = vmatprep.subr.mxu0 0.0
  %1392 = vmatpush2.msra.mxu0 0.0
  %1393 = vmatprep.subr.mxu0 0.0
  %1394 = vmatpush2.msra.mxu0 0.0
  %1395 = vmatprep.subr.mxu0 0.0
  %1396 = vmatpush2.msra.mxu0 0.0
  %1397 = vmatprep.subr.mxu0 0.0
  %1398 = vmatpush2.msra.mxu0 0.0
  %1399 = vmatprep.subr.mxu0 0.0
  %1400 = vmatpush2.msra.mxu0 0.0
  %1401 = vmatprep.subr.mxu0 0.0
  %1402 = vmatpush2.msra.mxu0 0.0
  %1403 = vmatprep.subr.mxu0 0.0
  %1404 = vmatpush2.msra.mxu0 0.0
  %1405 = vmatprep.subr.mxu0 0.0
  %1406 = vmatpush2.msra.mxu0 0.0
  %1407 = vmatprep.subr.mxu0 0.0
  %1408 = vmatpush2.msra.mxu0 0.0
  %1409 = vmatprep.subr.mxu0 0.0
  %1410 = vmatpush2.msra.mxu0 0.0
  %1411 = vmatprep.subr.mxu0 0.0
  %1412 = vmatpush2.msra.mxu0 0.0
  %1413 = vmatprep.subr.mxu0 0.0
  %1414 = vmatpush2.msra.mxu0 0.0
  %1415 = vmatprep.subr.mxu0 0.0
  %1416 = vmatpush2.msra.mxu0 0.0
  %1417 = vmatprep.subr.mxu0 0.0
  %1418 = vmatpush2.msra.mxu0 0.0
  %1419 = vmatprep.subr.mxu0 0.0
  %1420 = vmatpush2.msra.mxu0 0.0
  %1421 = vmatprep.mubr.f32.mxu0 0.0
  %1422 = vmatmul.mubr.f32.gmra.mxu0 %v1213
  %v1423 = vpop.f32.mrf.mxu0
  %v1424 = vadd.f32 %v1353, %v1423
  %v1425 = vpop.f32.mrf.mxu0
  %v1426 = vadd.f32 %v1355, %v1425
  %1427 = vdwg.mxu0
  %1428 = vmatprep.subr.mxu0 0.0
  %1429 = vmatpush1.msra.mxu0 %v1021
  %1430 = vmatprep.subr.mxu0 0.0
  %1431 = vmatpush1.msra.mxu0 %v1018
  %1432 = vmatprep.subr.mxu0 0.0
  %1433 = vmatpush1.msra.mxu0 %v1015
  %1434 = vmatprep.subr.mxu0 0.0
  %1435 = vmatpush1.msra.mxu0 %v1012
  %1436 = vmatprep.subr.mxu0 0.0
  %1437 = vmatpush1.msra.mxu0 %v1009
  %1438 = vmatprep.subr.mxu0 0.0
  %1439 = vmatpush1.msra.mxu0 %v1006
  %1440 = vmatprep.subr.mxu0 0.0
  %1441 = vmatpush1.msra.mxu0 %v1003
  %1442 = vmatprep.subr.mxu0 0.0
  %1443 = vmatpush1.msra.mxu0 %v1000
  %1444 = vmatprep.subr.mxu0 0.0
  %1445 = vmatpush1.msra.mxu0 %v997
  %1446 = vmatprep.subr.mxu0 0.0
  %1447 = vmatpush1.msra.mxu0 %v994
  %1448 = vmatprep.subr.mxu0 0.0
  %1449 = vmatpush1.msra.mxu0 %v991
  %1450 = vmatprep.subr.mxu0 0.0
  %1451 = vmatpush1.msra.mxu0 %v988
  %1452 = vmatprep.subr.mxu0 0.0
  %1453 = vmatpush1.msra.mxu0 %v985
  %1454 = vmatprep.subr.mxu0 0.0
  %1455 = vmatpush1.msra.mxu0 %v982
  %1456 = vmatprep.subr.mxu0 0.0
  %1457 = vmatpush1.msra.mxu0 %v979
  %1458 = vmatprep.subr.mxu0 0.0
  %1459 = vmatpush1.msra.mxu0 %v976
  %1460 = vmatprep.subr.mxu0 0.0
  %1461 = vmatpush2.msra.mxu0 %v1069
  %1462 = vmatprep.subr.mxu0 0.0
  %1463 = vmatpush2.msra.mxu0 %v1066
  %1464 = vmatprep.subr.mxu0 0.0
  %1465 = vmatpush2.msra.mxu0 %v1063
  %1466 = vmatprep.subr.mxu0 0.0
  %1467 = vmatpush2.msra.mxu0 %v1060
  %1468 = vmatprep.subr.mxu0 0.0
  %1469 = vmatpush2.msra.mxu0 %v1057
  %1470 = vmatprep.subr.mxu0 0.0
  %1471 = vmatpush2.msra.mxu0 %v1054
  %1472 = vmatprep.subr.mxu0 0.0
  %1473 = vmatpush2.msra.mxu0 %v1051
  %1474 = vmatprep.subr.mxu0 0.0
  %1475 = vmatpush2.msra.mxu0 %v1048
  %1476 = vmatprep.subr.mxu0 0.0
  %1477 = vmatpush2.msra.mxu0 %v1045
  %1478 = vmatprep.subr.mxu0 0.0
  %1479 = vmatpush2.msra.mxu0 %v1042
  %1480 = vmatprep.subr.mxu0 0.0
  %1481 = vmatpush2.msra.mxu0 %v1039
  %1482 = vmatprep.subr.mxu0 0.0
  %1483 = vmatpush2.msra.mxu0 %v1036
  %1484 = vmatprep.subr.mxu0 0.0
  %1485 = vmatpush2.msra.mxu0 %v1033
  %1486 = vmatprep.subr.mxu0 0.0
  %1487 = vmatpush2.msra.mxu0 %v1030
  %1488 = vmatprep.subr.mxu0 0.0
  %1489 = vmatpush2.msra.mxu0 %v1027
  %1490 = vmatprep.subr.mxu0 0.0
  %1491 = vmatpush2.msra.mxu0 %v1024
  %1492 = vmatprep.mubr.f32.mxu0 %v641
  %1493 = vmatmul.mubr.f32.gmra.mxu0 %v640
  %v1494 = vpop.f32.mrf.mxu0
  %v1495 = vadd.f32 0.0, %v1494
  %v1496 = vpop.f32.mrf.mxu0
  %1497 = vdwg.mxu0
  %1498 = vmatprep.subr.mxu0 0.0
  %1499 = vmatpush1.msra.mxu0 %v1117
  %1500 = vmatprep.subr.mxu0 0.0
  %1501 = vmatpush1.msra.mxu0 %v1114
  %1502 = vmatprep.subr.mxu0 0.0
  %1503 = vmatpush1.msra.mxu0 %v1111
  %1504 = vmatprep.subr.mxu0 0.0
  %1505 = vmatpush1.msra.mxu0 %v1108
  %1506 = vmatprep.subr.mxu0 0.0
  %1507 = vmatpush1.msra.mxu0 %v1105
  %1508 = vmatprep.subr.mxu0 0.0
  %1509 = vmatpush1.msra.mxu0 %v1102
  %1510 = vmatprep.subr.mxu0 0.0
  %1511 = vmatpush1.msra.mxu0 %v1099
  %1512 = vmatprep.subr.mxu0 0.0
  %1513 = vmatpush1.msra.mxu0 %v1096
  %1514 = vmatprep.subr.mxu0 0.0
  %1515 = vmatpush1.msra.mxu0 %v1093
  %1516 = vmatprep.subr.mxu0 0.0
  %1517 = vmatpush1.msra.mxu0 %v1090
  %1518 = vmatprep.subr.mxu0 0.0
  %1519 = vmatpush1.msra.mxu0 %v1087
  %1520 = vmatprep.subr.mxu0 0.0
  %1521 = vmatpush1.msra.mxu0 %v1084
  %1522 = vmatprep.subr.mxu0 0.0
  %1523 = vmatpush1.msra.mxu0 %v1081
  %1524 = vmatprep.subr.mxu0 0.0
  %1525 = vmatpush1.msra.mxu0 %v1078
  %1526 = vmatprep.subr.mxu0 0.0
  %1527 = vmatpush1.msra.mxu0 %v1075
  %1528 = vmatprep.subr.mxu0 0.0
  %1529 = vmatpush1.msra.mxu0 %v1072
  %1530 = vmatprep.subr.mxu0 0.0
  %1531 = vmatpush2.msra.mxu0 %v1165
  %1532 = vmatprep.subr.mxu0 0.0
  %1533 = vmatpush2.msra.mxu0 %v1162
  %1534 = vmatprep.subr.mxu0 0.0
  %1535 = vmatpush2.msra.mxu0 %v1159
  %1536 = vmatprep.subr.mxu0 0.0
  %1537 = vmatpush2.msra.mxu0 %v1156
  %1538 = vmatprep.subr.mxu0 0.0
  %1539 = vmatpush2.msra.mxu0 %v1153
  %1540 = vmatprep.subr.mxu0 0.0
  %1541 = vmatpush2.msra.mxu0 %v1150
  %1542 = vmatprep.subr.mxu0 0.0
  %1543 = vmatpush2.msra.mxu0 %v1147
  %1544 = vmatprep.subr.mxu0 0.0
  %1545 = vmatpush2.msra.mxu0 %v1144
  %1546 = vmatprep.subr.mxu0 0.0
  %1547 = vmatpush2.msra.mxu0 %v1141
  %1548 = vmatprep.subr.mxu0 0.0
  %1549 = vmatpush2.msra.mxu0 %v1138
  %1550 = vmatprep.subr.mxu0 0.0
  %1551 = vmatpush2.msra.mxu0 %v1135
  %1552 = vmatprep.subr.mxu0 0.0
  %1553 = vmatpush2.msra.mxu0 %v1132
  %1554 = vmatprep.subr.mxu0 0.0
  %1555 = vmatpush2.msra.mxu0 %v1129
  %1556 = vmatprep.subr.mxu0 0.0
  %1557 = vmatpush2.msra.mxu0 %v1126
  %1558 = vmatprep.subr.mxu0 0.0
  %1559 = vmatpush2.msra.mxu0 %v1123
  %1560 = vmatprep.subr.mxu0 0.0
  %1561 = vmatpush2.msra.mxu0 %v1120
  %1562 = vmatprep.mubr.f32.mxu0 %v643
  %1563 = vmatmul.mubr.f32.gmra.mxu0 %v642
  %v1564 = vpop.f32.mrf.mxu0
  %v1565 = vadd.f32 %v1495, %v1564
  %v1566 = vpop.f32.mrf.mxu0
  %1567 = vdwg.mxu0
  %1568 = vmatprep.subr.mxu0 0.0
  %1569 = vmatpush1.msra.mxu0 0.0
  %1570 = vmatprep.subr.mxu0 0.0
  %1571 = vmatpush1.msra.mxu0 %v1210
  %1572 = vmatprep.subr.mxu0 0.0
  %1573 = vmatpush1.msra.mxu0 %v1207
  %1574 = vmatprep.subr.mxu0 0.0
  %1575 = vmatpush1.msra.mxu0 %v1204
  %1576 = vmatprep.subr.mxu0 0.0
  %1577 = vmatpush1.msra.mxu0 %v1201
  %1578 = vmatprep.subr.mxu0 0.0
  %1579 = vmatpush1.msra.mxu0 %v1198
  %1580 = vmatprep.subr.mxu0 0.0
  %1581 = vmatpush1.msra.mxu0 %v1195
  %1582 = vmatprep.subr.mxu0 0.0
  %1583 = vmatpush1.msra.mxu0 %v1192
  %1584 = vmatprep.subr.mxu0 0.0
  %1585 = vmatpush1.msra.mxu0 %v1189
  %1586 = vmatprep.subr.mxu0 0.0
  %1587 = vmatpush1.msra.mxu0 %v1186
  %1588 = vmatprep.subr.mxu0 0.0
  %1589 = vmatpush1.msra.mxu0 %v1183
  %1590 = vmatprep.subr.mxu0 0.0
  %1591 = vmatpush1.msra.mxu0 %v1180
  %1592 = vmatprep.subr.mxu0 0.0
  %1593 = vmatpush1.msra.mxu0 %v1177
  %1594 = vmatprep.subr.mxu0 0.0
  %1595 = vmatpush1.msra.mxu0 %v1174
  %1596 = vmatprep.subr.mxu0 0.0
  %1597 = vmatpush1.msra.mxu0 %v1171
  %1598 = vmatprep.subr.mxu0 0.0
  %1599 = vmatpush1.msra.mxu0 %v1168
  %1600 = vmatprep.subr.mxu0 0.0
  %1601 = vmatpush2.msra.mxu0 0.0
  %1602 = vmatprep.subr.mxu0 0.0
  %1603 = vmatpush2.msra.mxu0 0.0
  %1604 = vmatprep.subr.mxu0 0.0
  %1605 = vmatpush2.msra.mxu0 0.0
  %1606 = vmatprep.subr.mxu0 0.0
  %1607 = vmatpush2.msra.mxu0 0.0
  %1608 = vmatprep.subr.mxu0 0.0
  %1609 = vmatpush2.msra.mxu0 0.0
  %1610 = vmatprep.subr.mxu0 0.0
  %1611 = vmatpush2.msra.mxu0 0.0
  %1612 = vmatprep.subr.mxu0 0.0
  %1613 = vmatpush2.msra.mxu0 0.0
  %1614 = vmatprep.subr.mxu0 0.0
  %1615 = vmatpush2.msra.mxu0 0.0
  %1616 = vmatprep.subr.mxu0 0.0
  %1617 = vmatpush2.msra.mxu0 0.0
  %1618 = vmatprep.subr.mxu0 0.0
  %1619 = vmatpush2.msra.mxu0 0.0
  %1620 = vmatprep.subr.mxu0 0.0
  %1621 = vmatpush2.msra.mxu0 0.0
  %1622 = vmatprep.subr.mxu0 0.0
  %1623 = vmatpush2.msra.mxu0 0.0
  %1624 = vmatprep.subr.mxu0 0.0
  %1625 = vmatpush2.msra.mxu0 0.0
  %1626 = vmatprep.subr.mxu0 0.0
  %1627 = vmatpush2.msra.mxu0 0.0
  %1628 = vmatprep.subr.mxu0 0.0
  %1629 = vmatpush2.msra.mxu0 0.0
  %1630 = vmatprep.subr.mxu0 0.0
  %1631 = vmatpush2.msra.mxu0 0.0
  %1632 = vmatprep.mubr.f32.mxu0 0.0
  %1633 = vmatmul.mubr.f32.gmra.mxu0 %v1213
  %v1634 = vpop.f32.mrf.mxu0
  %v1635 = vadd.f32 %v1565, %v1634
  %v1636 = vpop.f32.mrf.mxu0
  %1637 = vdwg.mxu0
  %v1638 = vld [vmem:[%s3] sm:$0xff]
  %v1639 = vld [vmem:[%s3 + $0x8] sm:$0xff]
  %1643 = vrot.lane.b32.xlu0 %v1424, 127
  %v1644 = vpop.permute.xlu0 %1643
  %1645 = vrot.lane.b32.xlu0 %v1426, 127
  %v1646 = vpop.permute.xlu0 %1645
  %1647 = vrot.lane.b32.xlu0 %v1635, 127
  %v1648 = vpop.permute.xlu0 %1647
  %v1649 = vsel %vm55, %v1644, %v1646
  %v1650 = vsel %vm55, %v1646, %v1648
  %1653 = vrot.lane.b32.xlu0 %v1424, 126
  %v1654 = vpop.permute.xlu0 %1653
  %1655 = vrot.lane.b32.xlu0 %v1426, 126
  %v1656 = vpop.permute.xlu0 %1655
  %1657 = vrot.lane.b32.xlu0 %v1635, 126
  %v1658 = vpop.permute.xlu0 %1657
  %v1659 = vsel %vm82, %v1654, %v1656
  %v1660 = vsel %vm82, %v1656, %v1658
  %1663 = vrot.lane.b32.xlu0 %v1424, 118
  %v1664 = vpop.permute.xlu0 %1663
  %1665 = vrot.lane.b32.xlu0 %v1426, 118
  %v1666 = vpop.permute.xlu0 %1665
  %1667 = vrot.lane.b32.xlu0 %v1635, 118
  %v1668 = vpop.permute.xlu0 %1667
  %vm1669 = vcmask 965632
  %v1670 = vsel %vm1669, %v1664, %v1666
  %v1671 = vsel %vm1669, %v1666, %v1668
  %1674 = vrot.lane.b32.xlu0 %v1424, 117
  %v1675 = vpop.permute.xlu0 %1674
  %1676 = vrot.lane.b32.xlu0 %v1426, 117
  %v1677 = vpop.permute.xlu0 %1676
  %1678 = vrot.lane.b32.xlu0 %v1635, 117
  %v1679 = vpop.permute.xlu0 %1678
  %vm1680 = vcmask 957440
  %v1681 = vsel %vm1680, %v1675, %v1677
  %v1682 = vsel %vm1680, %v1677, %v1679
  %1685 = vrot.lane.b32.xlu0 %v1424, 116
  %v1686 = vpop.permute.xlu0 %1685
  %1687 = vrot.lane.b32.xlu0 %v1426, 116
  %v1688 = vpop.permute.xlu0 %1687
  %1689 = vrot.lane.b32.xlu0 %v1635, 116
  %v1690 = vpop.permute.xlu0 %1689
  %vm1691 = vcmask 949248
  %v1692 = vsel %vm1691, %v1686, %v1688
  %v1693 = vsel %vm1691, %v1688, %v1690
  %1696 = vrot.lane.b32.xlu0 %v1424, 108
  %v1697 = vpop.permute.xlu0 %1696
  %1698 = vrot.lane.b32.xlu0 %v1426, 108
  %v1699 = vpop.permute.xlu0 %1698
  %1700 = vrot.lane.b32.xlu0 %v1635, 108
  %v1701 = vpop.permute.xlu0 %1700
  %v1702 = vsel %vm163, %v1697, %v1699
  %v1703 = vsel %vm163, %v1699, %v1701
  %1706 = vrot.lane.b32.xlu0 %v1424, 107
  %v1707 = vpop.permute.xlu0 %1706
  %1708 = vrot.lane.b32.xlu0 %v1426, 107
  %v1709 = vpop.permute.xlu0 %1708
  %1710 = vrot.lane.b32.xlu0 %v1635, 107
  %v1711 = vpop.permute.xlu0 %1710
  %vm1712 = vcmask 875520
  %v1713 = vsel %vm1712, %v1707, %v1709
  %v1714 = vsel %vm1712, %v1709, %v1711
  %1717 = vrot.lane.b32.xlu0 %v1424, 106
  %v1718 = vpop.permute.xlu0 %1717
  %1719 = vrot.lane.b32.xlu0 %v1426, 106
  %v1720 = vpop.permute.xlu0 %1719
  %1721 = vrot.lane.b32.xlu0 %v1635, 106
  %v1722 = vpop.permute.xlu0 %1721
  %vm1723 = vcmask 867328
  %v1724 = vsel %vm1723, %v1718, %v1720
  %v1725 = vsel %vm1723, %v1720, %v1722
  %v1728 = vld [vmem:[%s5] sm:$0xff]
  %v1729 = vld [vmem:[%s5 + $0x8] sm:$0xff]
  %1731 = vset.pattern.permute.xlu0 2
  %1732 = vperm.xlu0 %1731, %v1728
  %v1733 = vpop.permute.xlu0 %1732
  %1736 = vset.pattern.permute.xlu0 2
  %1737 = vperm.xlu0 %1736, %v1729
  %v1738 = vpop.permute.xlu0 %1737
  %v1741 = vsel %vm257, %v1638, 0
  %v1744 = vsel %vm257, %v1639, 0
  %1746 = vmatprep.subr.mxu0 0.0
  %1747 = vmatpush1.msra.mxu0 0.0
  %1748 = vmatprep.subr.mxu0 0.0
  %1749 = vmatpush1.msra.mxu0 0.0
  %1750 = vmatprep.subr.mxu0 0.0
  %1751 = vmatpush1.msra.mxu0 0.0
  %1752 = vmatprep.subr.mxu0 0.0
  %1753 = vmatpush1.msra.mxu0 0.0
  %1754 = vmatprep.subr.mxu0 0.0
  %1755 = vmatpush1.msra.mxu0 0.0
  %1756 = vmatprep.subr.mxu0 0.0
  %1757 = vmatpush1.msra.mxu0 0.0
  %1758 = vmatprep.subr.mxu0 0.0
  %1759 = vmatpush1.msra.mxu0 0.0
  %1760 = vmatprep.subr.mxu0 %v1725
  %1761 = vmatpush1.msra.mxu0 %v1724
  %1762 = vmatprep.subr.mxu0 %v1714
  %1763 = vmatpush1.msra.mxu0 %v1713
  %1764 = vmatprep.subr.mxu0 %v1703
  %1765 = vmatpush1.msra.mxu0 %v1702
  %1766 = vmatprep.subr.mxu0 %v1693
  %1767 = vmatpush1.msra.mxu0 %v1692
  %1768 = vmatprep.subr.mxu0 %v1682
  %1769 = vmatpush1.msra.mxu0 %v1681
  %1770 = vmatprep.subr.mxu0 %v1671
  %1771 = vmatpush1.msra.mxu0 %v1670
  %1772 = vmatprep.subr.mxu0 %v1660
  %1773 = vmatpush1.msra.mxu0 %v1659
  %1774 = vmatprep.subr.mxu0 %v1650
  %1775 = vmatpush1.msra.mxu0 %v1649
  %1776 = vmatprep.subr.mxu0 %v1426
  %1777 = vmatpush1.msra.mxu0 %v1424
  %1778 = vmatprep.subr.mxu0 0.0
  %1779 = vmatpush2.msra.mxu0 0.0
  %1780 = vmatprep.subr.mxu0 0.0
  %1781 = vmatpush2.msra.mxu0 0.0
  %1782 = vmatprep.subr.mxu0 0.0
  %1783 = vmatpush2.msra.mxu0 0.0
  %1784 = vmatprep.subr.mxu0 0.0
  %1785 = vmatpush2.msra.mxu0 0.0
  %1786 = vmatprep.subr.mxu0 0.0
  %1787 = vmatpush2.msra.mxu0 0.0
  %1788 = vmatprep.subr.mxu0 0.0
  %1789 = vmatpush2.msra.mxu0 0.0
  %1790 = vmatprep.subr.mxu0 0.0
  %1791 = vmatpush2.msra.mxu0 0.0
  %1792 = vmatprep.subr.mxu0 0.0
  %1793 = vmatpush2.msra.mxu0 0.0
  %1794 = vmatprep.subr.mxu0 0.0
  %1795 = vmatpush2.msra.mxu0 0.0
  %1796 = vmatprep.subr.mxu0 0.0
  %1797 = vmatpush2.msra.mxu0 0.0
  %1798 = vmatprep.subr.mxu0 0.0
  %1799 = vmatpush2.msra.mxu0 0.0
  %1800 = vmatprep.subr.mxu0 0.0
  %1801 = vmatpush2.msra.mxu0 0.0
  %1802 = vmatprep.subr.mxu0 0.0
  %1803 = vmatpush2.msra.mxu0 0.0
  %1804 = vmatprep.subr.mxu0 0.0
  %1805 = vmatpush2.msra.mxu0 0.0
  %1806 = vmatprep.subr.mxu0 0.0
  %1807 = vmatpush2.msra.mxu0 0.0
  %1808 = vmatprep.subr.mxu0 0.0
  %1809 = vmatpush2.msra.mxu0 0.0
  %1810 = vmatprep.mubr.f32.mxu0 0.0
  %1811 = vmatmul.mubr.f32.gmra.mxu0 %v1741
  %v1812 = vpop.f32.mrf.mxu0
  %v1813 = vadd.f32 %v1733, %v1812
  %v1814 = vpop.f32.mrf.mxu0
  %v1815 = vadd.f32 %v1733, %v1814
  %1816 = vmatprep.mubr.f32.mxu0 0.0
  %1817 = vmatmul.mubr.f32.gmra.mxu0 %v1744
  %v1818 = vpop.f32.mrf.mxu0
  %v1819 = vadd.f32 %v1738, %v1818
  %v1820 = vpop.f32.mrf.mxu0
  %v1821 = vadd.f32 %v1738, %v1820
  %1822 = vdwg.mxu0
  %v1823 = vmax.f32 %v1813, 0.0
  %v1824 = vmax.f32 %v1815, 0.0
  %v1825 = vmax.f32 %v1819, 0.0
  %v1826 = vmax.f32 %v1821, 0.0
  %s1827 = scalar_lea.vmem %s6, 24
  %v1828 = vld [vmem:[%s1827] ss:$8 sm:$0x3]
  %1833 = vrot.lane.b32.xlu0 %v1823, 127
  %v1834 = vpop.permute.xlu0 %1833
  %1835 = vrot.lane.b32.xlu0 %v1824, 127
  %v1836 = vpop.permute.xlu0 %1835
  %1837 = vrot.lane.b32.xlu0 %v1825, 127
  %v1838 = vpop.permute.xlu0 %1837
  %1839 = vrot.lane.b32.xlu0 %v1826, 127
  %v1840 = vpop.permute.xlu0 %1839
  %v1841 = vsel %vm55, %v1834, %v1836
  %v1842 = vsel %vm55, %v1838, %v1840
  %v1847 = vmax.f32 %v1823, %v1841
  %v1848 = vmax.f32 %v1824, %v1836
  %v1849 = vmax.f32 %v1825, %v1842
  %v1850 = vmax.f32 %v1826, %v1840
  %1855 = vrot.lane.b32.xlu0 %v1847, 118
  %v1856 = vpop.permute.xlu0 %1855
  %1857 = vrot.lane.b32.xlu0 %v1848, 118
  %v1858 = vpop.permute.xlu0 %1857
  %1859 = vrot.lane.b32.xlu0 %v1849, 118
  %v1860 = vpop.permute.xlu0 %1859
  %1861 = vrot.lane.b32.xlu0 %v1850, 118
  %v1862 = vpop.permute.xlu0 %1861
  %v1863 = vsel %vm1669, %v1856, %v1858
  %v1864 = vsel %vm1669, %v1860, %v1862
  %v1869 = vmax.f32 %v1847, %v1863
  %v1870 = vmax.f32 %v1848, %v1858
  %v1871 = vmax.f32 %v1849, %v1864
  %v1872 = vmax.f32 %v1850, %v1862
  %v1873 = vlaneseq
  %v1874 = vshrl.u32 %v1873, 7
  %v1875 = vsub.s32 0, %v1874
  %v1876 = vrot.slane %v1828, %v1875
  %v1877 = vlaneseq
  %v1878 = vshrl.u32 %v1877, 7
  %v1879 = vsub.s32 1, %v1878
  %v1880 = vrot.slane %v1828, %v1879
  %vm1881 = vcmp.eq.s32.totalorder %v646, %v1876
  %vm1882 = vcmp.eq.s32.totalorder %v646, %v1880
  %vm1883 = vcmp.eq.s32.totalorder %v647, %v1876
  %vm1884 = vcmp.eq.s32.totalorder %v647, %v1880
  %vm1885 = vcmp.eq.s32.totalorder %v648, %v1876
  %vm1886 = vcmp.eq.s32.totalorder %v648, %v1880
  %vm1887 = vcmp.eq.s32.totalorder %v649, %v1876
  %vm1888 = vcmp.eq.s32.totalorder %v649, %v1880
  %vm1889 = vcmp.eq.s32.totalorder %v650, %v1876
  %vm1890 = vcmp.eq.s32.totalorder %v650, %v1880
  %vm1891 = vcmp.eq.s32.totalorder %v651, %v1876
  %vm1892 = vcmp.eq.s32.totalorder %v651, %v1880
  %vm1893 = vcmp.eq.s32.totalorder %v652, %v1876
  %vm1894 = vcmp.eq.s32.totalorder %v652, %v1880
  %vm1895 = vcmp.eq.s32.totalorder %v653, %v1876
  %vm1896 = vcmp.eq.s32.totalorder %v653, %v1880
  %vm1897 = vcmp.eq.s32.totalorder %v654, %v1876
  %vm1898 = vcmp.eq.s32.totalorder %v654, %v1880
  %vm1899 = vcmp.eq.s32.totalorder %v655, %v1876
  %vm1900 = vcmp.eq.s32.totalorder %v655, %v1880
  %vm1901 = vcmp.eq.s32.totalorder %v656, %v1876
  %vm1902 = vcmp.eq.s32.totalorder %v656, %v1880
  %vm1903 = vcmp.eq.s32.totalorder %v657, %v1876
  %vm1904 = vcmp.eq.s32.totalorder %v657, %v1880
  %vm1905 = vcmp.eq.s32.totalorder %v658, %v1876
  %vm1906 = vcmp.eq.s32.totalorder %v658, %v1880
  %vm1907 = vcmp.eq.s32.totalorder %v659, %v1876
  %vm1908 = vcmp.eq.s32.totalorder %v659, %v1880
  %vm1909 = vcmp.eq.s32.totalorder %v660, %v1876
  %vm1910 = vcmp.eq.s32.totalorder %v660, %v1880
  %vm1911 = vcmp.eq.s32.totalorder %v661, %v1876
  %vm1912 = vcmp.eq.s32.totalorder %v661, %v1880
  %vm1913 = vcmp.eq.s32.totalorder %v662, %v1876
  %vm1914 = vcmp.eq.s32.totalorder %v662, %v1880
  %vm1915 = vcmp.eq.s32.totalorder %v663, %v1876
  %vm1916 = vcmp.eq.s32.totalorder %v663, %v1880
  %vm1917 = vcmp.eq.s32.totalorder %v664, %v1876
  %vm1918 = vcmp.eq.s32.totalorder %v664, %v1880
  %vm1919 = vcmp.eq.s32.totalorder %v665, %v1876
  %vm1920 = vcmp.eq.s32.totalorder %v665, %v1880
  %vm1921 = vcmp.eq.s32.totalorder %v666, %v1876
  %vm1922 = vcmp.eq.s32.totalorder %v666, %v1880
  %vm1923 = vcmp.eq.s32.totalorder %v667, %v1876
  %vm1924 = vcmp.eq.s32.totalorder %v667, %v1880
  %vm1925 = vcmp.eq.s32.totalorder %v668, %v1876
  %vm1926 = vcmp.eq.s32.totalorder %v668, %v1880
  %vm1927 = vcmp.eq.s32.totalorder %v669, %v1876
  %vm1928 = vcmp.eq.s32.totalorder %v669, %v1880
  %v1929 = vsel %vm1881, 1.0, 0.0
  %v1930 = vsel %vm1882, 1.0, 0.0
  %v1931 = vsel %vm1883, 1.0, 0.0
  %v1932 = vsel %vm1884, 1.0, 0.0
  %v1933 = vsel %vm1885, 1.0, 0.0
  %v1934 = vsel %vm1886, 1.0, 0.0
  %v1935 = vsel %vm1887, 1.0, 0.0
  %v1936 = vsel %vm1888, 1.0, 0.0
  %v1937 = vsel %vm1889, 1.0, 0.0
  %v1938 = vsel %vm1890, 1.0, 0.0
  %v1939 = vsel %vm1891, 1.0, 0.0
  %v1940 = vsel %vm1892, 1.0, 0.0
  %v1941 = vsel %vm1893, 1.0, 0.0
  %v1942 = vsel %vm1894, 1.0, 0.0
  %v1943 = vsel %vm1895, 1.0, 0.0
  %v1944 = vsel %vm1896, 1.0, 0.0
  %v1945 = vsel %vm1897, 1.0, 0.0
  %v1946 = vsel %vm1898, 1.0, 0.0
  %v1947 = vsel %vm1899, 1.0, 0.0
  %v1948 = vsel %vm1900, 1.0, 0.0
  %v1949 = vsel %vm1901, 1.0, 0.0
  %v1950 = vsel %vm1902, 1.0, 0.0
  %v1951 = vsel %vm1903, 1.0, 0.0
  %v1952 = vsel %vm1904, 1.0, 0.0
  %v1953 = vsel %vm1905, 1.0, 0.0
  %v1954 = vsel %vm1906, 1.0, 0.0
  %v1955 = vsel %vm1907, 1.0, 0.0
  %v1956 = vsel %vm1908, 1.0, 0.0
  %v1957 = vsel %vm1909, 1.0, 0.0
  %v1958 = vsel %vm1910, 1.0, 0.0
  %v1959 = vsel %vm1911, 1.0, 0.0
  %v1960 = vsel %vm1912, 1.0, 0.0
  %v1961 = vsel %vm1913, 1.0, 0.0
  %v1962 = vsel %vm1914, 1.0, 0.0
  %v1963 = vsel %vm1915, 1.0, 0.0
  %v1964 = vsel %vm1916, 1.0, 0.0
  %v1965 = vsel %vm1917, 1.0, 0.0
  %v1966 = vsel %vm1918, 1.0, 0.0
  %v1967 = vsel %vm1919, 1.0, 0.0
  %v1968 = vsel %vm1920, 1.0, 0.0
  %v1969 = vsel %vm1921, 1.0, 0.0
  %v1970 = vsel %vm1922, 1.0, 0.0
  %v1971 = vsel %vm1923, 1.0, 0.0
  %v1972 = vsel %vm1924, 1.0, 0.0
  %v1973 = vsel %vm1925, 1.0, 0.0
  %v1974 = vsel %vm1926, 1.0, 0.0
  %v1975 = vsel %vm1927, 1.0, 0.0
  %v1976 = vsel %vm1928, 1.0, 0.0
  %vm1977 = vcmask 523264
  %v1979 = vsel %vm1977, %v1870, 0
  %v1982 = vsel %vm1977, %v1872, 0
  %1984 = vmatprep.subr.mxu0 %v1960
  %1985 = vmatpush1.msra.mxu0 %v1959
  %1986 = vmatprep.subr.mxu0 %v1958
  %1987 = vmatpush1.msra.mxu0 %v1957
  %1988 = vmatprep.subr.mxu0 %v1956
  %1989 = vmatpush1.msra.mxu0 %v1955
  %1990 = vmatprep.subr.mxu0 %v1954
  %1991 = vmatpush1.msra.mxu0 %v1953
  %1992 = vmatprep.subr.mxu0 %v1952
  %1993 = vmatpush1.msra.mxu0 %v1951
  %1994 = vmatprep.subr.mxu0 %v1950
  %1995 = vmatpush1.msra.mxu0 %v1949
  %1996 = vmatprep.subr.mxu0 %v1948
  %1997 = vmatpush1.msra.mxu0 %v1947
  %1998 = vmatprep.subr.mxu0 %v1946
  %1999 = vmatpush1.msra.mxu0 %v1945
  %2000 = vmatprep.subr.mxu0 %v1944
  %2001 = vmatpush1.msra.mxu0 %v1943
  %2002 = vmatprep.subr.mxu0 %v1942
  %2003 = vmatpush1.msra.mxu0 %v1941
  %2004 = vmatprep.subr.mxu0 %v1940
  %2005 = vmatpush1.msra.mxu0 %v1939
  %2006 = vmatprep.subr.mxu0 %v1938
  %2007 = vmatpush1.msra.mxu0 %v1937
  %2008 = vmatprep.subr.mxu0 %v1936
  %2009 = vmatpush1.msra.mxu0 %v1935
  %2010 = vmatprep.subr.mxu0 %v1934
  %2011 = vmatpush1.msra.mxu0 %v1933
  %2012 = vmatprep.subr.mxu0 %v1932
  %2013 = vmatpush1.msra.mxu0 %v1931
  %2014 = vmatprep.subr.mxu0 %v1930
  %2015 = vmatpush1.msra.mxu0 %v1929
  %2016 = vmatprep.subr.mxu0 0.0
  %2017 = vmatpush2.msra.mxu0 0.0
  %2018 = vmatprep.subr.mxu0 0.0
  %2019 = vmatpush2.msra.mxu0 0.0
  %2020 = vmatprep.subr.mxu0 0.0
  %2021 = vmatpush2.msra.mxu0 0.0
  %2022 = vmatprep.subr.mxu0 0.0
  %2023 = vmatpush2.msra.mxu0 0.0
  %2024 = vmatprep.subr.mxu0 0.0
  %2025 = vmatpush2.msra.mxu0 0.0
  %2026 = vmatprep.subr.mxu0 0.0
  %2027 = vmatpush2.msra.mxu0 0.0
  %2028 = vmatprep.subr.mxu0 0.0
  %2029 = vmatpush2.msra.mxu0 0.0
  %2030 = vmatprep.subr.mxu0 0.0
  %2031 = vmatpush2.msra.mxu0 0.0
  %2032 = vmatprep.subr.mxu0 %v1976
  %2033 = vmatpush2.msra.mxu0 %v1975
  %2034 = vmatprep.subr.mxu0 %v1974
  %2035 = vmatpush2.msra.mxu0 %v1973
  %2036 = vmatprep.subr.mxu0 %v1972
  %2037 = vmatpush2.msra.mxu0 %v1971
  %2038 = vmatprep.subr.mxu0 %v1970
  %2039 = vmatpush2.msra.mxu0 %v1969
  %2040 = vmatprep.subr.mxu0 %v1968
  %2041 = vmatpush2.msra.mxu0 %v1967
  %2042 = vmatprep.subr.mxu0 %v1966
  %2043 = vmatpush2.msra.mxu0 %v1965
  %2044 = vmatprep.subr.mxu0 %v1964
  %2045 = vmatpush2.msra.mxu0 %v1963
  %2046 = vmatprep.subr.mxu0 %v1962
  %2047 = vmatpush2.msra.mxu0 %v1961
  %2048 = vmatprep.mubr.f32.mxu0 %v1979
  %2049 = vmatmul.mubr.f32.gmra.mxu0 %v1869
  %v2050 = vpop.f32.mrf.mxu0
  %v2051 = vadd.f32 0.0, %v2050
  %v2052 = vpop.f32.mrf.mxu0
  %v2053 = vadd.f32 0.0, %v2052
  %2054 = vmatprep.mubr.f32.mxu0 %v1982
  %2055 = vmatmul.mubr.f32.gmra.mxu0 %v1871
  %v2056 = vpop.f32.mrf.mxu0
  %v2057 = vadd.f32 0.0, %v2056
  %v2058 = vpop.f32.mrf.mxu0
  %v2059 = vadd.f32 0.0, %v2058
  %2060 = vdwg.mxu0
  %v2061 = vld [vmem:[%s4] sm:$0xff]
  %v2062 = vld [vmem:[%s4 + $0x8] sm:$0xff]
  %v2063 = vld [vmem:[%s4 + $0x10] sm:$0xff]
  %v2064 = vld [vmem:[%s4 + $0x18] sm:$0xff]
  %v2065 = vld [vmem:[%s4 + $0x20] sm:$0xff]
  %v2066 = vld [vmem:[%s4 + $0x28] sm:$0xff]
  %2071 = vrot.lane.b32.xlu0 %v2051, 127
  %v2072 = vpop.permute.xlu0 %2071
  %2073 = vrot.lane.b32.xlu0 %v2053, 127
  %v2074 = vpop.permute.xlu0 %2073
  %2075 = vrot.lane.b32.xlu0 %v2057, 127
  %v2076 = vpop.permute.xlu0 %2075
  %2077 = vrot.lane.b32.xlu0 %v2059, 127
  %v2078 = vpop.permute.xlu0 %2077
  %v2079 = vsel %vm55, %v2072, %v2074
  %v2080 = vsel %vm55, %v2076, %v2078
  %2083 = vrot.lane.b32.xlu0 %v2051, 126
  %v2084 = vpop.permute.xlu0 %2083
  %2085 = vrot.lane.b32.xlu0 %v2053, 126
  %v2086 = vpop.permute.xlu0 %2085
  %2087 = vrot.lane.b32.xlu0 %v2057, 126
  %v2088 = vpop.permute.xlu0 %2087
  %2089 = vrot.lane.b32.xlu0 %v2059, 126
  %v2090 = vpop.permute.xlu0 %2089
  %v2091 = vsel %vm82, %v2084, %v2086
  %v2092 = vsel %vm82, %v2088, %v2090
  %2095 = vrot.lane.b32.xlu0 %v2051, 122
  %v2096 = vpop.permute.xlu0 %2095
  %2097 = vrot.lane.b32.xlu0 %v2053, 122
  %v2098 = vpop.permute.xlu0 %2097
  %2099 = vrot.lane.b32.xlu0 %v2057, 122
  %v2100 = vpop.permute.xlu0 %2099
  %2101 = vrot.lane.b32.xlu0 %v2059, 122
  %v2102 = vpop.permute.xlu0 %2101
  %vm2103 = vcmask 998400
  %v2104 = vsel %vm2103, %v2096, %v2098
  %v2105 = vsel %vm2103, %v2100, %v2102
  %2108 = vrot.lane.b32.xlu0 %v2051, 121
  %v2109 = vpop.permute.xlu0 %2108
  %2110 = vrot.lane.b32.xlu0 %v2053, 121
  %v2111 = vpop.permute.xlu0 %2110
  %2112 = vrot.lane.b32.xlu0 %v2057, 121
  %v2113 = vpop.permute.xlu0 %2112
  %2114 = vrot.lane.b32.xlu0 %v2059, 121
  %v2115 = vpop.permute.xlu0 %2114
  %vm2116 = vcmask 990208
  %v2117 = vsel %vm2116, %v2109, %v2111
  %v2118 = vsel %vm2116, %v2113, %v2115
  %2121 = vrot.lane.b32.xlu0 %v2051, 120
  %v2122 = vpop.permute.xlu0 %2121
  %2123 = vrot.lane.b32.xlu0 %v2053, 120
  %v2124 = vpop.permute.xlu0 %2123
  %2125 = vrot.lane.b32.xlu0 %v2057, 120
  %v2126 = vpop.permute.xlu0 %2125
  %2127 = vrot.lane.b32.xlu0 %v2059, 120
  %v2128 = vpop.permute.xlu0 %2127
  %v2129 = vsel %vm1211, %v2122, %v2124
  %v2130 = vsel %vm1211, %v2126, %v2128
  %2133 = vrot.lane.b32.xlu0 %v2051, 116
  %v2134 = vpop.permute.xlu0 %2133
  %2135 = vrot.lane.b32.xlu0 %v2053, 116
  %v2136 = vpop.permute.xlu0 %2135
  %2137 = vrot.lane.b32.xlu0 %v2057, 116
  %v2138 = vpop.permute.xlu0 %2137
  %2139 = vrot.lane.b32.xlu0 %v2059, 116
  %v2140 = vpop.permute.xlu0 %2139
  %v2141 = vsel %vm1691, %v2134, %v2136
  %v2142 = vsel %vm1691, %v2138, %v2140
  %2145 = vrot.lane.b32.xlu0 %v2051, 115
  %v2146 = vpop.permute.xlu0 %2145
  %2147 = vrot.lane.b32.xlu0 %v2053, 115
  %v2148 = vpop.permute.xlu0 %2147
  %2149 = vrot.lane.b32.xlu0 %v2057, 115
  %v2150 = vpop.permute.xlu0 %2149
  %2151 = vrot.lane.b32.xlu0 %v2059, 115
  %v2152 = vpop.permute.xlu0 %2151
  %vm2153 = vcmask 941056
  %v2154 = vsel %vm2153, %v2146, %v2148
  %v2155 = vsel %vm2153, %v2150, %v2152
  %2158 = vrot.lane.b32.xlu0 %v2051, 114
  %v2159 = vpop.permute.xlu0 %2158
  %2160 = vrot.lane.b32.xlu0 %v2053, 114
  %v2161 = vpop.permute.xlu0 %2160
  %2162 = vrot.lane.b32.xlu0 %v2057, 114
  %v2163 = vpop.permute.xlu0 %2162
  %2164 = vrot.lane.b32.xlu0 %v2059, 114
  %v2165 = vpop.permute.xlu0 %2164
  %vm2166 = vcmask 932864
  %v2167 = vsel %vm2166, %v2159, %v2161
  %v2168 = vsel %vm2166, %v2163, %v2165
  %v2171 = vld [vmem:[%s5] sm:$0xff]
  %v2172 = vld [vmem:[%s5 + $0x8] sm:$0xff]
  %v2173 = vld [vmem:[%s5 + $0x10] sm:$0xff]
  %2175 = vset.pattern.permute.xlu0 3
  %2176 = vperm.xlu0 %2175, %v2171
  %v2177 = vpop.permute.xlu0 %2176
  %2180 = vset.pattern.permute.xlu0 3
  %2181 = vperm.xlu0 %2180, %v2172
  %v2182 = vpop.permute.xlu0 %2181
  %2185 = vset.pattern.permute.xlu0 3
  %2186 = vperm.xlu0 %2185, %v2173
  %v2187 = vpop.permute.xlu0 %2186
  %vm2189 = vcmask 130048
  %v2191 = vsel %vm2189, %v2062, 0
  %v2194 = vsel %vm2189, %v2064, 0
  %v2197 = vsel %vm2189, %v2066, 0
  %2199 = vmatprep.subr.mxu0 0.0
  %2200 = vmatpush1.msra.mxu0 %v2155
  %2201 = vmatprep.subr.mxu0 0.0
  %2202 = vmatpush1.msra.mxu0 %v2154
  %2203 = vmatprep.subr.mxu0 0.0
  %2204 = vmatpush1.msra.mxu0 %v2142
  %2205 = vmatprep.subr.mxu0 0.0
  %2206 = vmatpush1.msra.mxu0 %v2141
  %2207 = vmatprep.subr.mxu0 0.0
  %2208 = vmatpush1.msra.mxu0 %v2130
  %2209 = vmatprep.subr.mxu0 0.0
  %2210 = vmatpush1.msra.mxu0 %v2129
  %2211 = vmatprep.subr.mxu0 0.0
  %2212 = vmatpush1.msra.mxu0 %v2118
  %2213 = vmatprep.subr.mxu0 0.0
  %2214 = vmatpush1.msra.mxu0 %v2117
  %2215 = vmatprep.subr.mxu0 0.0
  %2216 = vmatpush1.msra.mxu0 %v2105
  %2217 = vmatprep.subr.mxu0 0.0
  %2218 = vmatpush1.msra.mxu0 %v2104
  %2219 = vmatprep.subr.mxu0 0.0
  %2220 = vmatpush1.msra.mxu0 %v2092
  %2221 = vmatprep.subr.mxu0 0.0
  %2222 = vmatpush1.msra.mxu0 %v2091
  %2223 = vmatprep.subr.mxu0 0.0
  %2224 = vmatpush1.msra.mxu0 %v2080
  %2225 = vmatprep.subr.mxu0 0.0
  %2226 = vmatpush1.msra.mxu0 %v2079
  %2227 = vmatprep.subr.mxu0 0.0
  %2228 = vmatpush1.msra.mxu0 %v2057
  %2229 = vmatprep.subr.mxu0 0.0
  %2230 = vmatpush1.msra.mxu0 %v2051
  %2231 = vmatprep.subr.mxu0 0.0
  %2232 = vmatpush2.msra.mxu0 0.0
  %2233 = vmatprep.subr.mxu0 0.0
  %2234 = vmatpush2.msra.mxu0 0.0
  %2235 = vmatprep.subr.mxu0 0.0
  %2236 = vmatpush2.msra.mxu0 0.0
  %2237 = vmatprep.subr.mxu0 0.0
  %2238 = vmatpush2.msra.mxu0 0.0
  %2239 = vmatprep.subr.mxu0 0.0
  %2240 = vmatpush2.msra.mxu0 0.0
  %2241 = vmatprep.subr.mxu0 0.0
  %2242 = vmatpush2.msra.mxu0 0.0
  %2243 = vmatprep.subr.mxu0 0.0
  %2244 = vmatpush2.msra.mxu0 0.0
  %2245 = vmatprep.subr.mxu0 0.0
  %2246 = vmatpush2.msra.mxu0 0.0
  %2247 = vmatprep.subr.mxu0 0.0
  %2248 = vmatpush2.msra.mxu0 0.0
  %2249 = vmatprep.subr.mxu0 0.0
  %2250 = vmatpush2.msra.mxu0 0.0
  %2251 = vmatprep.subr.mxu0 0.0
  %2252 = vmatpush2.msra.mxu0 0.0
  %2253 = vmatprep.subr.mxu0 0.0
  %2254 = vmatpush2.msra.mxu0 0.0
  %2255 = vmatprep.subr.mxu0 0.0
  %2256 = vmatpush2.msra.mxu0 0.0
  %2257 = vmatprep.subr.mxu0 0.0
  %2258 = vmatpush2.msra.mxu0 0.0
  %2259 = vmatprep.subr.mxu0 0.0
  %2260 = vmatpush2.msra.mxu0 %v2168
  %2261 = vmatprep.subr.mxu0 0.0
  %2262 = vmatpush2.msra.mxu0 %v2167
  %2263 = vmatprep.mubr.f32.mxu0 %v2191
  %2264 = vmatmul.mubr.f32.gmra.mxu0 %v2061
  %v2265 = vpop.f32.mrf.mxu0
  %v2266 = vadd.f32 %v2177, %v2265
  %v2267 = vpop.f32.mrf.mxu0
  %2268 = vmatprep.mubr.f32.mxu0 %v2194
  %2269 = vmatmul.mubr.f32.gmra.mxu0 %v2063
  %v2270 = vpop.f32.mrf.mxu0
  %v2271 = vadd.f32 %v2182, %v2270
  %v2272 = vpop.f32.mrf.mxu0
  %2273 = vmatprep.mubr.f32.mxu0 %v2197
  %2274 = vmatmul.mubr.f32.gmra.mxu0 %v2065
  %v2275 = vpop.f32.mrf.mxu0
  %v2276 = vadd.f32 %v2187, %v2275
  %v2277 = vpop.f32.mrf.mxu0
  %2278 = vdwg.mxu0
  %v2279 = vmax.f32 %v2266, 0.0
  %v2280 = vmax.f32 %v2271, 0.0
  %v2281 = vmax.f32 %v2276, 0.0
  %v2282 = vld [vmem:[%s6 + $0x30] ss:$0 sm:$0xff]
  %2286 = vrot.lane.b32.xlu0 %v2279, 127
  %v2287 = vpop.permute.xlu0 %2286
  %2288 = vrot.lane.b32.xlu0 %v2280, 127
  %v2289 = vpop.permute.xlu0 %2288
  %2290 = vrot.lane.b32.xlu0 %v2281, 127
  %v2291 = vpop.permute.xlu0 %2290
  %v2295 = vmax.f32 %v2279, %v2287
  %v2296 = vmax.f32 %v2280, %v2289
  %v2297 = vmax.f32 %v2281, %v2291
  %2301 = vrot.lane.b32.xlu0 %v2295, 122
  %v2302 = vpop.permute.xlu0 %2301
  %2303 = vrot.lane.b32.xlu0 %v2296, 122
  %v2304 = vpop.permute.xlu0 %2303
  %2305 = vrot.lane.b32.xlu0 %v2297, 122
  %v2306 = vpop.permute.xlu0 %2305
  %v2310 = vmax.f32 %v2295, %v2302
  %v2311 = vmax.f32 %v2296, %v2304
  %v2312 = vmax.f32 %v2297, %v2306
  %vm2313 = vcmp.eq.s32.totalorder %v646, %v2282
  %vm2314 = vcmp.eq.s32.totalorder %v647, %v2282
  %vm2315 = vcmp.eq.s32.totalorder %v648, %v2282
  %vm2316 = vcmp.eq.s32.totalorder %v649, %v2282
  %vm2317 = vcmp.eq.s32.totalorder %v650, %v2282
  %vm2318 = vcmp.eq.s32.totalorder %v651, %v2282
  %vm2319 = vcmp.eq.s32.totalorder %v652, %v2282
  %vm2320 = vcmp.eq.s32.totalorder %v653, %v2282
  %vm2321 = vcmp.eq.s32.totalorder %v654, %v2282
  %v2322 = vsel %vm2313, 1.0, 0.0
  %v2323 = vsel %vm2314, 1.0, 0.0
  %v2324 = vsel %vm2315, 1.0, 0.0
  %v2325 = vsel %vm2316, 1.0, 0.0
  %v2326 = vsel %vm2317, 1.0, 0.0
  %v2327 = vsel %vm2318, 1.0, 0.0
  %v2328 = vsel %vm2319, 1.0, 0.0
  %v2329 = vsel %vm2320, 1.0, 0.0
  %v2330 = vsel %vm2321, 1.0, 0.0
  %v2332 = vsel %vm257, %v2310, 0
  %v2335 = vsel %vm257, %v2311, 0
  %v2338 = vsel %vm257, %v2312, 0
  %2340 = vmatprep.subr.mxu0 0.0
  %2341 = vmatpush1.msra.mxu0 0.0
  %2342 = vmatprep.subr.mxu0 0.0
  %2343 = vmatpush1.msra.mxu0 0.0
  %2344 = vmatprep.subr.mxu0 0.0
  %2345 = vmatpush1.msra.mxu0 0.0
  %2346 = vmatprep.subr.mxu0 0.0
  %2347 = vmatpush1.msra.mxu0 0.0
  %2348 = vmatprep.subr.mxu0 0.0
  %2349 = vmatpush1.msra.mxu0 0.0
  %2350 = vmatprep.subr.mxu0 0.0
  %2351 = vmatpush1.msra.mxu0 0.0
  %2352 = vmatprep.subr.mxu0 0.0
  %2353 = vmatpush1.msra.mxu0 0.0
  %2354 = vmatprep.subr.mxu0 0.0
  %2355 = vmatpush1.msra.mxu0 %v2330
  %2356 = vmatprep.subr.mxu0 0.0
  %2357 = vmatpush1.msra.mxu0 %v2329
  %2358 = vmatprep.subr.mxu0 0.0
  %2359 = vmatpush1.msra.mxu0 %v2328
  %2360 = vmatprep.subr.mxu0 0.0
  %2361 = vmatpush1.msra.mxu0 %v2327
  %2362 = vmatprep.subr.mxu0 0.0
  %2363 = vmatpush1.msra.mxu0 %v2326
  %2364 = vmatprep.subr.mxu0 0.0
  %2365 = vmatpush1.msra.mxu0 %v2325
  %2366 = vmatprep.subr.mxu0 0.0
  %2367 = vmatpush1.msra.mxu0 %v2324
  %2368 = vmatprep.subr.mxu0 0.0
  %2369 = vmatpush1.msra.mxu0 %v2323
  %2370 = vmatprep.subr.mxu0 0.0
  %2371 = vmatpush1.msra.mxu0 %v2322
  %2372 = vmatprep.subr.mxu0 0.0
  %2373 = vmatpush2.msra.mxu0 0.0
  %2374 = vmatprep.subr.mxu0 0.0
  %2375 = vmatpush2.msra.mxu0 0.0
  %2376 = vmatprep.subr.mxu0 0.0
  %2377 = vmatpush2.msra.mxu0 0.0
  %2378 = vmatprep.subr.mxu0 0.0
  %2379 = vmatpush2.msra.mxu0 0.0
  %2380 = vmatprep.subr.mxu0 0.0
  %2381 = vmatpush2.msra.mxu0 0.0
  %2382 = vmatprep.subr.mxu0 0.0
  %2383 = vmatpush2.msra.mxu0 0.0
  %2384 = vmatprep.subr.mxu0 0.0
  %2385 = vmatpush2.msra.mxu0 0.0
  %2386 = vmatprep.subr.mxu0 0.0
  %2387 = vmatpush2.msra.mxu0 0.0
  %2388 = vmatprep.subr.mxu0 0.0
  %2389 = vmatpush2.msra.mxu0 0.0
  %2390 = vmatprep.subr.mxu0 0.0
  %2391 = vmatpush2.msra.mxu0 0.0
  %2392 = vmatprep.subr.mxu0 0.0
  %2393 = vmatpush2.msra.mxu0 0.0
  %2394 = vmatprep.subr.mxu0 0.0
  %2395 = vmatpush2.msra.mxu0 0.0
  %2396 = vmatprep.subr.mxu0 0.0
  %2397 = vmatpush2.msra.mxu0 0.0
  %2398 = vmatprep.subr.mxu0 0.0
  %2399 = vmatpush2.msra.mxu0 0.0
  %2400 = vmatprep.subr.mxu0 0.0
  %2401 = vmatpush2.msra.mxu0 0.0
  %2402 = vmatprep.subr.mxu0 0.0
  %2403 = vmatpush2.msra.mxu0 0.0
  %2404 = vmatprep.mubr.f32.mxu0 0.0
  %2405 = vmatmul.mubr.f32.gmra.mxu0 %v2332
  %v2406 = vpop.f32.mrf.mxu0
  %v2407 = vadd.f32 0.0, %v2406
  %v2408 = vpop.f32.mrf.mxu0
  %2409 = vmatprep.mubr.f32.mxu0 0.0
  %2410 = vmatmul.mubr.f32.gmra.mxu0 %v2335
  %v2411 = vpop.f32.mrf.mxu0
  %v2412 = vadd.f32 0.0, %v2411
  %v2413 = vpop.f32.mrf.mxu0
  %2414 = vmatprep.mubr.f32.mxu0 0.0
  %2415 = vmatmul.mubr.f32.gmra.mxu0 %v2338
  %v2416 = vpop.f32.mrf.mxu0
  %v2417 = vadd.f32 0.0, %v2416
  %v2418 = vpop.f32.mrf.mxu0
  %2419 = vdwg.mxu0
  %2420 = vst [vmem:[%s7] sm:$0xff] %v2407
  %2421 = vst [vmem:[%s7 + $0x8] sm:$0xff] %v2412
  %2422 = vst [vmem:[%s7 + $0x10] sm:$0xff] %v2417
  // Predicated region
  $region30: #{fe_cnn_2_forward.1} parent=0 // pred_check
    _
  $region31: #{fe_cnn_2_forward.1} parent=0 // pred_check_branch
    %2424 = sbr.rel (0) target = $region33
  $region32: #{fe_cnn_2_forward.1} parent=0 // pred_region
    _
  $region33: #{fe_cnn_2_forward.1} parent=0 // pred_fallthru
    _
  // Predicated region
  $region34: #{fe_cnn_2_forward.1} parent=0 // pred_check
    _
  $region35: #{fe_cnn_2_forward.1} parent=0 // pred_check_branch
    %2426 = sbr.rel (0) target = $region37
  $region36: #{fe_cnn_2_forward.1} parent=0 // pred_region
    _
  $region37: #{fe_cnn_2_forward.1} parent=0 // pred_fallthru
    _

</llo_original>
